<compile_context>
chip_gen: v6e
topology: v6e:2x2x1
jax: 0.10.0
libtpu: 0.0.40
codegen_flags: <defaults>
</compile_context>

<pallas_src>
import functools

import jax
import jax.numpy as jnp
from jax.experimental import pallas as pl
from jax.experimental.pallas import tpu as pltpu


def _conformer_conv_kernel(x_ref, xl_ref, xr_ref, vec_ref, w1_ref, wdw_ref,
                           w2_ref, o_ref, ypad_ref, *, kernel_size, halo):
    """Fused ConformerConvModule forward for one (batch, time-tile) block.

    x_ref   : VMEM (T_t, D)        center rows of this time tile (also residual)
    xl_ref  : VMEM (HALO, D)       rows just before the tile (clamped at t=0)
    xr_ref  : VMEM (HALO, D)       rows just after the tile  (clamped at t=nT-1)
    vec_ref : VMEM (8, D)   f32    [ln_g, ln_b, b1a, b1b, b_dw, bn_scale, bn_shift, b2]
    w1_ref  : VMEM (D, 2D)  bf16   fused pointwise-conv1 weight (value | gate cols)
    wdw_ref : VMEM (K, D)   f32    depthwise conv weights, transposed
    w2_ref  : VMEM (D, D)   bf16   pointwise-conv2 weight, transposed
    o_ref   : VMEM (T_t, D)        output
    ypad_ref: VMEM (T_t + 2*HALO, D) f32 scratch holding the halo'd GLU output
    """
    f32 = jnp.float32
    bf16 = jnp.bfloat16
    T_t, D = x_ref.shape
    K = kernel_size
    pad = (K - 1) // 2

    vecs = vec_ref[...]                              # (8, D) f32
    ln_g, ln_b = vecs[0:1, :], vecs[1:2, :]
    b1a, b1b = vecs[2:3, :], vecs[3:4, :]
    b_dw = vecs[4:5, :]
    bn_scale, bn_shift = vecs[5:6, :], vecs[6:7, :]
    b2 = vecs[7:8, :]

    w1 = w1_ref[...]                                 # (D, 2D) bf16, resident

    def ln_glu(xblk):
        """LayerNorm (eps=1e-5, biased var) + fused pointwise conv1 + GLU."""
        xblk = xblk.astype(f32)
        mu = jnp.mean(xblk, axis=-1, keepdims=True)
        var = jnp.mean(jnp.square(xblk - mu), axis=-1, keepdims=True)
        h = (xblk - mu) * jax.lax.rsqrt(var + 1e-5)
        h = h * ln_g + ln_b
        pre = jnp.dot(h.astype(bf16), w1, preferred_element_type=f32)
        a = pre[:, :D] + b1a                         # GLU value half
        g = pre[:, D:] + b1b                         # GLU gate half
        return a * jax.nn.sigmoid(g)

    # Center rows of this tile.
    y_c = ln_glu(x_ref[...])                         # (T_t, D) f32

    # Halo rows: recompute LN/GLU; rows that fall outside the sequence (left
    # halo of the first tile / right halo of the last tile) are gated to zero,
    # which reproduces the SAME zero padding of the depthwise conv.
    t_id = pl.program_id(1)
    left_gate = (t_id > 0).astype(f32)
    right_gate = (t_id < pl.num_programs(1) - 1).astype(f32)
    y_l = ln_glu(xl_ref[...]) * left_gate            # (HALO, D)
    y_r = ln_glu(xr_ref[...]) * right_gate           # (HALO, D)

    ypad_ref[0:halo, :] = y_l
    ypad_ref[halo:halo + T_t, :] = y_c
    ypad_ref[halo + T_t:halo + T_t + halo, :] = y_r

    # --- depthwise conv along T (cross-correlation, SAME padding) ---
    # out[t] = sum_k w[k] * ypad[t + (halo - pad) + k]   -- no masks needed.
    wdw = wdw_ref[...]                               # (K, D) f32
    off = halo - pad                                 # == 1 for K=31, HALO=16
    acc = jnp.zeros((T_t, D), f32)
    for k in range(K):                               # K static -> unrolled
        acc = acc + ypad_ref[off + k:off + k + T_t, :] * wdw[k, :]

    # --- BatchNorm (eval, folded) + SiLU ---
    z = acc + b_dw
    z = z * bn_scale + bn_shift
    z = z * jax.nn.sigmoid(z)

    # --- pointwise conv2 + Dropout(eval = identity) + residual ---
    out = jnp.dot(z.astype(bf16), w2_ref[...], preferred_element_type=f32) + b2
    o_ref[...] = (out + x_ref[...].astype(f32)).astype(o_ref.dtype)


def conformer_conv_module(x, params, *, kernel_size=31, t_tile=None):
    """Eval-mode ConformerConvModule forward as one fused Pallas kernel call.

    D should be a multiple of 128 (lane axis) for best layout; T must be a
    multiple of t_tile, and t_tile a positive multiple of the 16-row halo.
    """
    B, T, D = x.shape
    K = kernel_size
    pad = (K - 1) // 2
    HALO = max(8, ((pad + 7) // 8) * 8)              # pad rounded up to sublanes

    if t_tile is None:
        t_tile = T
    T_t = t_tile
    if T % T_t != 0 or T_t % HALO != 0 or T_t < HALO:
        raise ValueError(f"t_tile={T_t} must divide T={T} and be a multiple of "
                         f"the halo ({HALO})")
    nT = T // T_t
    r = T_t // HALO                                  # halo blocks per time tile
    n_hblk = T // HALO                               # halo blocks along T

    f32 = jnp.float32
    bf16 = jnp.bfloat16

    # Fold BatchNorm (eval) into per-channel scale/shift.
    bn_scale = (params["bn_g"] / jnp.sqrt(params["bn_var"] + 1e-5)).astype(f32)
    bn_shift = (params["bn_b"] - params["bn_mean"] * bn_scale).astype(f32)

    b1 = params["b1"]
    vecs = jnp.stack(
        [params["ln_g"], params["ln_b"],
         b1[:D], b1[D:],
         params["b_dw"],
         bn_scale, bn_shift,
         params["b2"]],
        axis=0).astype(f32)                          # (8, D)

    w1_t = jnp.transpose(params["w1"]).astype(bf16)   # (D, 2D) fused GLU weight
    wdw_t = jnp.transpose(params["w_dw"]).astype(f32)  # (K, D)
    w2_t = jnp.transpose(params["w2"]).astype(bf16)   # (D, D)

    kernel = functools.partial(_conformer_conv_kernel, kernel_size=K, halo=HALO)

    # --- advisory cost estimate (post-restructuring) ---
    n_rows = B * T
    n_halo_rows = B * nT * 2 * HALO
    flops = int((n_rows + n_halo_rows) * (4 * D * D)          # fused GLU matmul
                + n_rows * (2 * D * D + 2 * K * D + 20 * D))  # conv2 + dwconv + VPU
    transcendentals = int((n_rows + n_halo_rows) * (D + 1) + n_rows * D)
    itemsize = x.dtype.itemsize
    bytes_accessed = int(itemsize * D * (2 * n_rows + n_halo_rows)
                         + 2 * (2 * D * D + D * D)            # bf16 weights
                         + 4 * (K + 8) * D)

    # --- VMEM budget heuristic: raise the scoped limit only for big tiles ---
    blk_in = T_t * D * itemsize
    blk_halo = HALO * D * itemsize
    weights = 2 * (2 * D * D + D * D) + 4 * (K + 8) * D
    scratch = (T_t + 2 * HALO) * D * 4
    live_tmp = 10 * T_t * D * 4                      # rough bound on live f32 temps
    vmem_est = 2 * (2 * blk_in + 2 * blk_halo) + weights + scratch + live_tmp
    cp_kwargs = dict(dimension_semantics=("parallel", "parallel"))
    if vmem_est > 16 * 1024 * 1024:
        # TODO(synk): on v7x (64 MiB physical VMEM) pick t_tile so this stays
        #             well under ~48 MiB; on v5e/v6e up to ~100 MiB is usable.
        cp_kwargs["vmem_limit_bytes"] = min(int(vmem_est * 1.25), 100 * 1024 * 1024)

    return pl.pallas_call(
        kernel,
        out_shape=jax.ShapeDtypeStruct((B, T, D), x.dtype),
        grid=(B, nT),
        in_specs=[
            # center rows of the time tile (also the residual)
            pl.BlockSpec((None, T_t, D), lambda b, t: (b, t, 0)),
            # left halo: HALO rows just before the tile (clamped; gated at t=0)
            pl.BlockSpec((None, HALO, D),
                         lambda b, t: (b, jnp.maximum(t * r - 1, 0), 0)),
            # right halo: HALO rows just after the tile (clamped; gated at t=nT-1)
            pl.BlockSpec((None, HALO, D),
                         lambda b, t: (b, jnp.minimum((t + 1) * r, n_hblk - 1), 0)),
            # weights / folded per-channel params: constant index -> stay resident
            pl.BlockSpec((8, D), lambda b, t: (0, 0)),
            pl.BlockSpec((D, 2 * D), lambda b, t: (0, 0)),
            pl.BlockSpec((K, D), lambda b, t: (0, 0)),
            pl.BlockSpec((D, D), lambda b, t: (0, 0)),
        ],
        out_specs=pl.BlockSpec((None, T_t, D), lambda b, t: (b, t, 0)),
        scratch_shapes=[pltpu.VMEM((T_t + 2 * HALO, D), jnp.float32)],
        compiler_params=pltpu.CompilerParams(**cp_kwargs),
        cost_estimate=pl.CostEstimate(
            flops=flops,
            transcendentals=transcendentals,
            bytes_accessed=bytes_accessed),
    )(x, x, x, vecs, w1_t, wdw_t, w2_t)


def _reference(x, p, kernel_size):
    """Plain-JAX reference of the torch module (eval mode).

    Mirrors the kernel's MXU precision choice: the two pointwise convs are
    computed from bf16-rounded operands with f32 accumulation; everything else
    (LN, GLU gate, depthwise conv, BN, SiLU, residual) is f32.
    """
    B, T, D = x.shape
    K = kernel_size
    pad = (K - 1) // 2
    bf16 = jnp.bfloat16

    residual = x
    mu = jnp.mean(x, axis=-1, keepdims=True)
    var = jnp.mean(jnp.square(x - mu), axis=-1, keepdims=True)
    h = (x - mu) / jnp.sqrt(var + 1e-5) * p["ln_g"] + p["ln_b"]
    pre = jnp.einsum("btd,cd->btc", h.astype(bf16), p["w1"].astype(bf16),
                     preferred_element_type=jnp.float32) + p["b1"]
    a, g = pre[..., :D], pre[..., D:]
    y = a * jax.nn.sigmoid(g)
    ypad = jnp.pad(y, ((0, 0), (pad, pad), (0, 0)))
    z = jnp.zeros_like(y)
    for k in range(K):
        z = z + ypad[:, k:k + T, :] * p["w_dw"][:, k]
    z = z + p["b_dw"]
    z = (z - p["bn_mean"]) / jnp.sqrt(p["bn_var"] + 1e-5) * p["bn_g"] + p["bn_b"]
    z = z * jax.nn.sigmoid(z)
    out = jnp.einsum("btd,cd->btc", z.astype(bf16), p["w2"].astype(bf16),
                     preferred_element_type=jnp.float32) + p["b2"]
    return out + residual


if __name__ == "__main__":
    # Small but representative: 2 time tiles of 32 rows each (exercises the
    # halo path), D = 128 so blocks are lane-dense, K = 31 as in the module.
    B, T, D, K = 2, 64, 128, 31

    key = jax.random.PRNGKey(0)
    ks = jax.random.split(key, 13)
    s = 0.2
    x = jax.random.normal(ks[0], (B, T, D), jnp.float32)
    params = dict(
        ln_g=1.0 + 0.1 * jax.random.normal(ks[1], (D,), jnp.float32),
        ln_b=0.1 * jax.random.normal(ks[2], (D,), jnp.float32),
        w1=s * jax.random.normal(ks[3], (2 * D, D), jnp.float32),
        b1=0.1 * jax.random.normal(ks[4], (2 * D,), jnp.float32),
        w_dw=s * jax.random.normal(ks[5], (D, K), jnp.float32),
        b_dw=0.1 * jax.random.normal(ks[6], (D,), jnp.float32),
        bn_g=1.0 + 0.1 * jax.random.normal(ks[7], (D,), jnp.float32),
        bn_b=0.1 * jax.random.normal(ks[8], (D,), jnp.float32),
        bn_mean=0.1 * jax.random.normal(ks[9], (D,), jnp.float32),
        bn_var=1.0 + 0.1 * jnp.abs(jax.random.normal(ks[10], (D,), jnp.float32)),
        w2=s * jax.random.normal(ks[11], (D, D), jnp.float32),
        b2=0.1 * jax.random.normal(ks[12], (D,), jnp.float32),
    )

    out = conformer_conv_module(x, params, kernel_size=K, t_tile=32)
    out = jax.block_until_ready(out)

    ref = _reference(x, params, kernel_size=K)
    assert out.shape == x.shape
    max_err = float(jnp.max(jnp.abs(out - ref)))
    assert max_err < 2e-2, f"max abs err {max_err}"

    print("KERNEL_OK")
</pallas_src>

<mosaic_0001>
module attributes {stable_mosaic.version = 11 : i64} {
  func.func @_conformer_conv_kernel(%arg0: i32, %arg1: i32, %arg2: memref<1x32x128xf32, #tpu.memory_space<vmem>>, %arg3: memref<1x16x128xf32, #tpu.memory_space<vmem>>, %arg4: memref<1x16x128xf32, #tpu.memory_space<vmem>>, %arg5: memref<8x128xf32, #tpu.memory_space<vmem>>, %arg6: memref<128x256xbf16, #tpu.memory_space<vmem>>, %arg7: memref<31x128xf32, #tpu.memory_space<vmem>>, %arg8: memref<128x128xbf16, #tpu.memory_space<vmem>>, %arg9: memref<1x32x128xf32, #tpu.memory_space<vmem>>, %arg10: memref<64x128xf32, #tpu.memory_space<vmem>>) attributes {dimension_semantics = [#tpu.dimension_semantics<parallel>, #tpu.dimension_semantics<parallel>], iteration_bounds = array<i64: 2, 2>, scalar_prefetch = 0 : i64, scratch_operands = 1 : i64, tpu.core_type = #tpu.core_type<tc>, window_params = [{transform_indices = @transform_0, window_bounds = array<i64: 1, 32, 128>}, {transform_indices = @transform_1, window_bounds = array<i64: 1, 16, 128>}, {transform_indices = @transform_2, window_bounds = array<i64: 1, 16, 128>}, {pipeline_mode = #tpu.pipeline_mode<synchronous>, transform_indices = @transform_3, window_bounds = array<i64: 8, 128>}, {pipeline_mode = #tpu.pipeline_mode<synchronous>, transform_indices = @transform_4, window_bounds = array<i64: 128, 256>}, {pipeline_mode = #tpu.pipeline_mode<synchronous>, transform_indices = @transform_5, window_bounds = array<i64: 31, 128>}, {pipeline_mode = #tpu.pipeline_mode<synchronous>, transform_indices = @transform_6, window_bounds = array<i64: 128, 128>}, {transform_indices = @transform_7, window_bounds = array<i64: 1, 32, 128>}]} {
    %c0 = arith.constant 0 : index
    %c0_0 = arith.constant 0 : index
    %0 = vector.load %arg5[%c0, %c0_0] : memref<8x128xf32, #tpu.memory_space<vmem>>, vector<8x128xf32>
    %1 = vector.extract_strided_slice %0 {offsets = [0, 0], sizes = [1, 128], strides = [1, 1]} : vector<8x128xf32> to vector<1x128xf32>
    %2 = vector.extract_strided_slice %0 {offsets = [1, 0], sizes = [1, 128], strides = [1, 1]} : vector<8x128xf32> to vector<1x128xf32>
    %3 = vector.extract_strided_slice %0 {offsets = [2, 0], sizes = [1, 128], strides = [1, 1]} : vector<8x128xf32> to vector<1x128xf32>
    %4 = vector.extract_strided_slice %0 {offsets = [3, 0], sizes = [1, 128], strides = [1, 1]} : vector<8x128xf32> to vector<1x128xf32>
    %5 = vector.extract_strided_slice %0 {offsets = [4, 0], sizes = [1, 128], strides = [1, 1]} : vector<8x128xf32> to vector<1x128xf32>
    %6 = vector.extract_strided_slice %0 {offsets = [5, 0], sizes = [1, 128], strides = [1, 1]} : vector<8x128xf32> to vector<1x128xf32>
    %7 = vector.extract_strided_slice %0 {offsets = [6, 0], sizes = [1, 128], strides = [1, 1]} : vector<8x128xf32> to vector<1x128xf32>
    %8 = vector.extract_strided_slice %0 {offsets = [7, 0], sizes = [1, 128], strides = [1, 1]} : vector<8x128xf32> to vector<1x128xf32>
    %c0_1 = arith.constant 0 : index
    %c0_2 = arith.constant 0 : index
    %9 = vector.load %arg6[%c0_1, %c0_2] : memref<128x256xbf16, #tpu.memory_space<vmem>>, vector<128x256xbf16>
    %c0_3 = arith.constant 0 : index
    %c0_4 = arith.constant 0 : index
    %c0_5 = arith.constant 0 : index
    %10 = vector.load %arg2[%c0_3, %c0_4, %c0_5] : memref<1x32x128xf32, #tpu.memory_space<vmem>>, vector<1x32x128xf32>
    %11 = vector.shape_cast %10 : vector<1x32x128xf32> to vector<32x128xf32>
    %cst = arith.constant dense<0.000000e+00> : vector<32xf32>
    %12 = vector.multi_reduction <add>, %11, %cst [1] : vector<32x128xf32> to vector<32xf32>
    %13 = vector.shape_cast %12 : vector<32xf32> to vector<32x1xf32>
    %cst_6 = arith.constant 1.280000e+02 : f32
    %14 = vector.broadcast %cst_6 : f32 to vector<32x1xf32>
    %15 = arith.divf %13, %14 : vector<32x1xf32>
    %16 = vector.broadcast %15 : vector<32x1xf32> to vector<32x128xf32>
    %17 = arith.subf %11, %16 : vector<32x128xf32>
    %18 = arith.mulf %17, %17 : vector<32x128xf32>
    %cst_7 = arith.constant dense<0.000000e+00> : vector<32xf32>
    %19 = vector.multi_reduction <add>, %18, %cst_7 [1] : vector<32x128xf32> to vector<32xf32>
    %20 = vector.shape_cast %19 : vector<32xf32> to vector<32x1xf32>
    %cst_8 = arith.constant 1.280000e+02 : f32
    %21 = vector.broadcast %cst_8 : f32 to vector<32x1xf32>
    %22 = arith.divf %20, %21 : vector<32x1xf32>
    %23 = vector.broadcast %15 : vector<32x1xf32> to vector<32x128xf32>
    %24 = arith.subf %11, %23 : vector<32x128xf32>
    %cst_9 = arith.constant 9.99999974E-6 : f32
    %25 = vector.broadcast %cst_9 : f32 to vector<32x1xf32>
    %26 = arith.addf %22, %25 : vector<32x1xf32>
    %27 = math.rsqrt %26 : vector<32x1xf32>
    %28 = vector.broadcast %27 : vector<32x1xf32> to vector<32x128xf32>
    %29 = arith.mulf %24, %28 : vector<32x128xf32>
    %30 = vector.broadcast %1 : vector<1x128xf32> to vector<32x128xf32>
    %31 = arith.mulf %29, %30 : vector<32x128xf32>
    %32 = vector.broadcast %2 : vector<1x128xf32> to vector<32x128xf32>
    %33 = arith.addf %31, %32 : vector<32x128xf32>
    %34 = arith.truncf %33 : vector<32x128xf32> to vector<32x128xbf16>
    %cst_10 = arith.constant dense<0.000000e+00> : vector<32x256xf32>
    %35 = tpu.matmul %34, %9, %cst_10 {dimension_numbers = #tpu.dot_dimension_numbers<[1], [0], [0], [1], [0, 0, 1, 1], [], []>} : vector<32x128xbf16>, vector<128x256xbf16>, vector<32x256xf32> -> vector<32x256xf32>
    %36 = vector.extract_strided_slice %35 {offsets = [0, 0], sizes = [32, 128], strides = [1, 1]} : vector<32x256xf32> to vector<32x128xf32>
    %37 = vector.broadcast %3 : vector<1x128xf32> to vector<32x128xf32>
    %38 = arith.addf %36, %37 : vector<32x128xf32>
    %39 = vector.extract_strided_slice %35 {offsets = [0, 128], sizes = [32, 128], strides = [1, 1]} : vector<32x256xf32> to vector<32x128xf32>
    %40 = vector.broadcast %4 : vector<1x128xf32> to vector<32x128xf32>
    %41 = arith.addf %39, %40 : vector<32x128xf32>
    %42 = arith.negf %41 : vector<32x128xf32>
    %43 = math.exp %42 : vector<32x128xf32>
    %cst_11 = arith.constant 1.000000e+00 : f32
    %44 = vector.broadcast %cst_11 : f32 to vector<32x128xf32>
    %45 = arith.addf %44, %43 : vector<32x128xf32>
    %46 = arith.divf %44, %45 : vector<32x128xf32>
    %47 = arith.mulf %38, %46 : vector<32x128xf32>
    %c0_i32 = arith.constant 0 : i32
    %48 = arith.cmpi sgt, %arg1, %c0_i32 : i32
    %49 = arith.extui %48 : i1 to i32
    %50 = arith.sitofp %49 : i32 to f32
    %c1_i32 = arith.constant 1 : i32
    %51 = arith.cmpi slt, %arg1, %c1_i32 : i32
    %52 = arith.extui %51 : i1 to i32
    %53 = arith.sitofp %52 : i32 to f32
    %c0_12 = arith.constant 0 : index
    %c0_13 = arith.constant 0 : index
    %c0_14 = arith.constant 0 : index
    %54 = vector.load %arg3[%c0_12, %c0_13, %c0_14] : memref<1x16x128xf32, #tpu.memory_space<vmem>>, vector<1x16x128xf32>
    %55 = vector.shape_cast %54 : vector<1x16x128xf32> to vector<16x128xf32>
    %cst_15 = arith.constant dense<0.000000e+00> : vector<16xf32>
    %56 = vector.multi_reduction <add>, %55, %cst_15 [1] : vector<16x128xf32> to vector<16xf32>
    %57 = vector.shape_cast %56 : vector<16xf32> to vector<16x1xf32>
    %cst_16 = arith.constant 1.280000e+02 : f32
    %58 = vector.broadcast %cst_16 : f32 to vector<16x1xf32>
    %59 = arith.divf %57, %58 : vector<16x1xf32>
    %60 = vector.broadcast %59 : vector<16x1xf32> to vector<16x128xf32>
    %61 = arith.subf %55, %60 : vector<16x128xf32>
    %62 = arith.mulf %61, %61 : vector<16x128xf32>
    %cst_17 = arith.constant dense<0.000000e+00> : vector<16xf32>
    %63 = vector.multi_reduction <add>, %62, %cst_17 [1] : vector<16x128xf32> to vector<16xf32>
    %64 = vector.shape_cast %63 : vector<16xf32> to vector<16x1xf32>
    %cst_18 = arith.constant 1.280000e+02 : f32
    %65 = vector.broadcast %cst_18 : f32 to vector<16x1xf32>
    %66 = arith.divf %64, %65 : vector<16x1xf32>
    %67 = vector.broadcast %59 : vector<16x1xf32> to vector<16x128xf32>
    %68 = arith.subf %55, %67 : vector<16x128xf32>
    %cst_19 = arith.constant 9.99999974E-6 : f32
    %69 = vector.broadcast %cst_19 : f32 to vector<16x1xf32>
    %70 = arith.addf %66, %69 : vector<16x1xf32>
    %71 = math.rsqrt %70 : vector<16x1xf32>
    %72 = vector.broadcast %71 : vector<16x1xf32> to vector<16x128xf32>
    %73 = arith.mulf %68, %72 : vector<16x128xf32>
    %74 = vector.broadcast %1 : vector<1x128xf32> to vector<16x128xf32>
    %75 = arith.mulf %73, %74 : vector<16x128xf32>
    %76 = vector.broadcast %2 : vector<1x128xf32> to vector<16x128xf32>
    %77 = arith.addf %75, %76 : vector<16x128xf32>
    %78 = arith.truncf %77 : vector<16x128xf32> to vector<16x128xbf16>
    %cst_20 = arith.constant dense<0.000000e+00> : vector<16x256xf32>
    %79 = tpu.matmul %78, %9, %cst_20 {dimension_numbers = #tpu.dot_dimension_numbers<[1], [0], [0], [1], [0, 0, 1, 1], [], []>} : vector<16x128xbf16>, vector<128x256xbf16>, vector<16x256xf32> -> vector<16x256xf32>
    %80 = vector.extract_strided_slice %79 {offsets = [0, 0], sizes = [16, 128], strides = [1, 1]} : vector<16x256xf32> to vector<16x128xf32>
    %81 = vector.broadcast %3 : vector<1x128xf32> to vector<16x128xf32>
    %82 = arith.addf %80, %81 : vector<16x128xf32>
    %83 = vector.extract_strided_slice %79 {offsets = [0, 128], sizes = [16, 128], strides = [1, 1]} : vector<16x256xf32> to vector<16x128xf32>
    %84 = vector.broadcast %4 : vector<1x128xf32> to vector<16x128xf32>
    %85 = arith.addf %83, %84 : vector<16x128xf32>
    %86 = arith.negf %85 : vector<16x128xf32>
    %87 = math.exp %86 : vector<16x128xf32>
    %cst_21 = arith.constant 1.000000e+00 : f32
    %88 = vector.broadcast %cst_21 : f32 to vector<16x128xf32>
    %89 = arith.addf %88, %87 : vector<16x128xf32>
    %90 = arith.divf %88, %89 : vector<16x128xf32>
    %91 = arith.mulf %82, %90 : vector<16x128xf32>
    %92 = vector.broadcast %50 : f32 to vector<16x128xf32>
    %93 = arith.mulf %91, %92 : vector<16x128xf32>
    %c0_22 = arith.constant 0 : index
    %c0_23 = arith.constant 0 : index
    %c0_24 = arith.constant 0 : index
    %94 = vector.load %arg4[%c0_22, %c0_23, %c0_24] : memref<1x16x128xf32, #tpu.memory_space<vmem>>, vector<1x16x128xf32>
    %95 = vector.shape_cast %94 : vector<1x16x128xf32> to vector<16x128xf32>
    %cst_25 = arith.constant dense<0.000000e+00> : vector<16xf32>
    %96 = vector.multi_reduction <add>, %95, %cst_25 [1] : vector<16x128xf32> to vector<16xf32>
    %97 = vector.shape_cast %96 : vector<16xf32> to vector<16x1xf32>
    %cst_26 = arith.constant 1.280000e+02 : f32
    %98 = vector.broadcast %cst_26 : f32 to vector<16x1xf32>
    %99 = arith.divf %97, %98 : vector<16x1xf32>
    %100 = vector.broadcast %99 : vector<16x1xf32> to vector<16x128xf32>
    %101 = arith.subf %95, %100 : vector<16x128xf32>
    %102 = arith.mulf %101, %101 : vector<16x128xf32>
    %cst_27 = arith.constant dense<0.000000e+00> : vector<16xf32>
    %103 = vector.multi_reduction <add>, %102, %cst_27 [1] : vector<16x128xf32> to vector<16xf32>
    %104 = vector.shape_cast %103 : vector<16xf32> to vector<16x1xf32>
    %cst_28 = arith.constant 1.280000e+02 : f32
    %105 = vector.broadcast %cst_28 : f32 to vector<16x1xf32>
    %106 = arith.divf %104, %105 : vector<16x1xf32>
    %107 = vector.broadcast %99 : vector<16x1xf32> to vector<16x128xf32>
    %108 = arith.subf %95, %107 : vector<16x128xf32>
    %cst_29 = arith.constant 9.99999974E-6 : f32
    %109 = vector.broadcast %cst_29 : f32 to vector<16x1xf32>
    %110 = arith.addf %106, %109 : vector<16x1xf32>
    %111 = math.rsqrt %110 : vector<16x1xf32>
    %112 = vector.broadcast %111 : vector<16x1xf32> to vector<16x128xf32>
    %113 = arith.mulf %108, %112 : vector<16x128xf32>
    %114 = vector.broadcast %1 : vector<1x128xf32> to vector<16x128xf32>
    %115 = arith.mulf %113, %114 : vector<16x128xf32>
    %116 = vector.broadcast %2 : vector<1x128xf32> to vector<16x128xf32>
    %117 = arith.addf %115, %116 : vector<16x128xf32>
    %118 = arith.truncf %117 : vector<16x128xf32> to vector<16x128xbf16>
    %cst_30 = arith.constant dense<0.000000e+00> : vector<16x256xf32>
    %119 = tpu.matmul %118, %9, %cst_30 {dimension_numbers = #tpu.dot_dimension_numbers<[1], [0], [0], [1], [0, 0, 1, 1], [], []>} : vector<16x128xbf16>, vector<128x256xbf16>, vector<16x256xf32> -> vector<16x256xf32>
    %120 = vector.extract_strided_slice %119 {offsets = [0, 0], sizes = [16, 128], strides = [1, 1]} : vector<16x256xf32> to vector<16x128xf32>
    %121 = vector.broadcast %3 : vector<1x128xf32> to vector<16x128xf32>
    %122 = arith.addf %120, %121 : vector<16x128xf32>
    %123 = vector.extract_strided_slice %119 {offsets = [0, 128], sizes = [16, 128], strides = [1, 1]} : vector<16x256xf32> to vector<16x128xf32>
    %124 = vector.broadcast %4 : vector<1x128xf32> to vector<16x128xf32>
    %125 = arith.addf %123, %124 : vector<16x128xf32>
    %126 = arith.negf %125 : vector<16x128xf32>
    %127 = math.exp %126 : vector<16x128xf32>
    %cst_31 = arith.constant 1.000000e+00 : f32
    %128 = vector.broadcast %cst_31 : f32 to vector<16x128xf32>
    %129 = arith.addf %128, %127 : vector<16x128xf32>
    %130 = arith.divf %128, %129 : vector<16x128xf32>
    %131 = arith.mulf %122, %130 : vector<16x128xf32>
    %132 = vector.broadcast %53 : f32 to vector<16x128xf32>
    %133 = arith.mulf %131, %132 : vector<16x128xf32>
    %c0_32 = arith.constant 0 : index
    %c0_33 = arith.constant 0 : index
    %134 = vector.load %arg10[%c0_32, %c0_33] : memref<64x128xf32, #tpu.memory_space<vmem>>, vector<16x128xf32>
    tpu.vector_store %arg10[%c0_32, %c0_33], %93 {strides = array<i32>} : memref<64x128xf32, #tpu.memory_space<vmem>>, vector<16x128xf32>,
    %c16 = arith.constant 16 : index
    %c0_34 = arith.constant 0 : index
    %135 = vector.load %arg10[%c16, %c0_34] : memref<64x128xf32, #tpu.memory_space<vmem>>, vector<32x128xf32>
    tpu.vector_store %arg10[%c16, %c0_34], %47 {strides = array<i32>} : memref<64x128xf32, #tpu.memory_space<vmem>>, vector<32x128xf32>,
    %c48 = arith.constant 48 : index
    %c0_35 = arith.constant 0 : index
    %136 = vector.load %arg10[%c48, %c0_35] : memref<64x128xf32, #tpu.memory_space<vmem>>, vector<16x128xf32>
    tpu.vector_store %arg10[%c48, %c0_35], %133 {strides = array<i32>} : memref<64x128xf32, #tpu.memory_space<vmem>>, vector<16x128xf32>,
    %c0_36 = arith.constant 0 : index
    %c0_37 = arith.constant 0 : index
    %137 = vector.load %arg7[%c0_36, %c0_37] : memref<31x128xf32, #tpu.memory_space<vmem>>, vector<31x128xf32>
    %cst_38 = arith.constant 0.000000e+00 : f32
    %138 = vector.broadcast %cst_38 : f32 to vector<32x128xf32>
    %c1 = arith.constant 1 : index
    %c0_39 = arith.constant 0 : index
    %139 = vector.load %arg10[%c1, %c0_39] : memref<64x128xf32, #tpu.memory_space<vmem>>, vector<32x128xf32>
    %140 = vector.extract_strided_slice %137 {offsets = [0, 0], sizes = [1, 128], strides = [1, 1]} : vector<31x128xf32> to vector<1x128xf32>
    %141 = vector.shape_cast %140 : vector<1x128xf32> to vector<128xf32>
    %142 = vector.shape_cast %141 : vector<128xf32> to vector<1x128xf32>
    %143 = vector.broadcast %142 : vector<1x128xf32> to vector<32x128xf32>
    %144 = arith.mulf %139, %143 : vector<32x128xf32>
    %145 = arith.addf %138, %144 : vector<32x128xf32>
    %c2 = arith.constant 2 : index
    %c0_40 = arith.constant 0 : index
    %146 = vector.load %arg10[%c2, %c0_40] : memref<64x128xf32, #tpu.memory_space<vmem>>, vector<32x128xf32>
    %147 = vector.extract_strided_slice %137 {offsets = [1, 0], sizes = [1, 128], strides = [1, 1]} : vector<31x128xf32> to vector<1x128xf32>
    %148 = vector.shape_cast %147 : vector<1x128xf32> to vector<128xf32>
    %149 = vector.shape_cast %148 : vector<128xf32> to vector<1x128xf32>
    %150 = vector.broadcast %149 : vector<1x128xf32> to vector<32x128xf32>
    %151 = arith.mulf %146, %150 : vector<32x128xf32>
    %152 = arith.addf %145, %151 : vector<32x128xf32>
    %c3 = arith.constant 3 : index
    %c0_41 = arith.constant 0 : index
    %153 = vector.load %arg10[%c3, %c0_41] : memref<64x128xf32, #tpu.memory_space<vmem>>, vector<32x128xf32>
    %154 = vector.extract_strided_slice %137 {offsets = [2, 0], sizes = [1, 128], strides = [1, 1]} : vector<31x128xf32> to vector<1x128xf32>
    %155 = vector.shape_cast %154 : vector<1x128xf32> to vector<128xf32>
    %156 = vector.shape_cast %155 : vector<128xf32> to vector<1x128xf32>
    %157 = vector.broadcast %156 : vector<1x128xf32> to vector<32x128xf32>
    %158 = arith.mulf %153, %157 : vector<32x128xf32>
    %159 = arith.addf %152, %158 : vector<32x128xf32>
    %c4 = arith.constant 4 : index
    %c0_42 = arith.constant 0 : index
    %160 = vector.load %arg10[%c4, %c0_42] : memref<64x128xf32, #tpu.memory_space<vmem>>, vector<32x128xf32>
    %161 = vector.extract_strided_slice %137 {offsets = [3, 0], sizes = [1, 128], strides = [1, 1]} : vector<31x128xf32> to vector<1x128xf32>
    %162 = vector.shape_cast %161 : vector<1x128xf32> to vector<128xf32>
    %163 = vector.shape_cast %162 : vector<128xf32> to vector<1x128xf32>
    %164 = vector.broadcast %163 : vector<1x128xf32> to vector<32x128xf32>
    %165 = arith.mulf %160, %164 : vector<32x128xf32>
    %166 = arith.addf %159, %165 : vector<32x128xf32>
    %c5 = arith.constant 5 : index
    %c0_43 = arith.constant 0 : index
    %167 = vector.load %arg10[%c5, %c0_43] : memref<64x128xf32, #tpu.memory_space<vmem>>, vector<32x128xf32>
    %168 = vector.extract_strided_slice %137 {offsets = [4, 0], sizes = [1, 128], strides = [1, 1]} : vector<31x128xf32> to vector<1x128xf32>
    %169 = vector.shape_cast %168 : vector<1x128xf32> to vector<128xf32>
    %170 = vector.shape_cast %169 : vector<128xf32> to vector<1x128xf32>
    %171 = vector.broadcast %170 : vector<1x128xf32> to vector<32x128xf32>
    %172 = arith.mulf %167, %171 : vector<32x128xf32>
    %173 = arith.addf %166, %172 : vector<32x128xf32>
    %c6 = arith.constant 6 : index
    %c0_44 = arith.constant 0 : index
    %174 = vector.load %arg10[%c6, %c0_44] : memref<64x128xf32, #tpu.memory_space<vmem>>, vector<32x128xf32>
    %175 = vector.extract_strided_slice %137 {offsets = [5, 0], sizes = [1, 128], strides = [1, 1]} : vector<31x128xf32> to vector<1x128xf32>
    %176 = vector.shape_cast %175 : vector<1x128xf32> to vector<128xf32>
    %177 = vector.shape_cast %176 : vector<128xf32> to vector<1x128xf32>
    %178 = vector.broadcast %177 : vector<1x128xf32> to vector<32x128xf32>
    %179 = arith.mulf %174, %178 : vector<32x128xf32>
    %180 = arith.addf %173, %179 : vector<32x128xf32>
    %c7 = arith.constant 7 : index
    %c0_45 = arith.constant 0 : index
    %181 = vector.load %arg10[%c7, %c0_45] : memref<64x128xf32, #tpu.memory_space<vmem>>, vector<32x128xf32>
    %182 = vector.extract_strided_slice %137 {offsets = [6, 0], sizes = [1, 128], strides = [1, 1]} : vector<31x128xf32> to vector<1x128xf32>
    %183 = vector.shape_cast %182 : vector<1x128xf32> to vector<128xf32>
    %184 = vector.shape_cast %183 : vector<128xf32> to vector<1x128xf32>
    %185 = vector.broadcast %184 : vector<1x128xf32> to vector<32x128xf32>
    %186 = arith.mulf %181, %185 : vector<32x128xf32>
    %187 = arith.addf %180, %186 : vector<32x128xf32>
    %c8 = arith.constant 8 : index
    %c0_46 = arith.constant 0 : index
    %188 = vector.load %arg10[%c8, %c0_46] : memref<64x128xf32, #tpu.memory_space<vmem>>, vector<32x128xf32>
    %189 = vector.extract_strided_slice %137 {offsets = [7, 0], sizes = [1, 128], strides = [1, 1]} : vector<31x128xf32> to vector<1x128xf32>
    %190 = vector.shape_cast %189 : vector<1x128xf32> to vector<128xf32>
    %191 = vector.shape_cast %190 : vector<128xf32> to vector<1x128xf32>
    %192 = vector.broadcast %191 : vector<1x128xf32> to vector<32x128xf32>
    %193 = arith.mulf %188, %192 : vector<32x128xf32>
    %194 = arith.addf %187, %193 : vector<32x128xf32>
    %c9 = arith.constant 9 : index
    %c0_47 = arith.constant 0 : index
    %195 = vector.load %arg10[%c9, %c0_47] : memref<64x128xf32, #tpu.memory_space<vmem>>, vector<32x128xf32>
    %196 = vector.extract_strided_slice %137 {offsets = [8, 0], sizes = [1, 128], strides = [1, 1]} : vector<31x128xf32> to vector<1x128xf32>
    %197 = vector.shape_cast %196 : vector<1x128xf32> to vector<128xf32>
    %198 = vector.shape_cast %197 : vector<128xf32> to vector<1x128xf32>
    %199 = vector.broadcast %198 : vector<1x128xf32> to vector<32x128xf32>
    %200 = arith.mulf %195, %199 : vector<32x128xf32>
    %201 = arith.addf %194, %200 : vector<32x128xf32>
    %c10 = arith.constant 10 : index
    %c0_48 = arith.constant 0 : index
    %202 = vector.load %arg10[%c10, %c0_48] : memref<64x128xf32, #tpu.memory_space<vmem>>, vector<32x128xf32>
    %203 = vector.extract_strided_slice %137 {offsets = [9, 0], sizes = [1, 128], strides = [1, 1]} : vector<31x128xf32> to vector<1x128xf32>
    %204 = vector.shape_cast %203 : vector<1x128xf32> to vector<128xf32>
    %205 = vector.shape_cast %204 : vector<128xf32> to vector<1x128xf32>
    %206 = vector.broadcast %205 : vector<1x128xf32> to vector<32x128xf32>
    %207 = arith.mulf %202, %206 : vector<32x128xf32>
    %208 = arith.addf %201, %207 : vector<32x128xf32>
    %c11 = arith.constant 11 : index
    %c0_49 = arith.constant 0 : index
    %209 = vector.load %arg10[%c11, %c0_49] : memref<64x128xf32, #tpu.memory_space<vmem>>, vector<32x128xf32>
    %210 = vector.extract_strided_slice %137 {offsets = [10, 0], sizes = [1, 128], strides = [1, 1]} : vector<31x128xf32> to vector<1x128xf32>
    %211 = vector.shape_cast %210 : vector<1x128xf32> to vector<128xf32>
    %212 = vector.shape_cast %211 : vector<128xf32> to vector<1x128xf32>
    %213 = vector.broadcast %212 : vector<1x128xf32> to vector<32x128xf32>
    %214 = arith.mulf %209, %213 : vector<32x128xf32>
    %215 = arith.addf %208, %214 : vector<32x128xf32>
    %c12 = arith.constant 12 : index
    %c0_50 = arith.constant 0 : index
    %216 = vector.load %arg10[%c12, %c0_50] : memref<64x128xf32, #tpu.memory_space<vmem>>, vector<32x128xf32>
    %217 = vector.extract_strided_slice %137 {offsets = [11, 0], sizes = [1, 128], strides = [1, 1]} : vector<31x128xf32> to vector<1x128xf32>
    %218 = vector.shape_cast %217 : vector<1x128xf32> to vector<128xf32>
    %219 = vector.shape_cast %218 : vector<128xf32> to vector<1x128xf32>
    %220 = vector.broadcast %219 : vector<1x128xf32> to vector<32x128xf32>
    %221 = arith.mulf %216, %220 : vector<32x128xf32>
    %222 = arith.addf %215, %221 : vector<32x128xf32>
    %c13 = arith.constant 13 : index
    %c0_51 = arith.constant 0 : index
    %223 = vector.load %arg10[%c13, %c0_51] : memref<64x128xf32, #tpu.memory_space<vmem>>, vector<32x128xf32>
    %224 = vector.extract_strided_slice %137 {offsets = [12, 0], sizes = [1, 128], strides = [1, 1]} : vector<31x128xf32> to vector<1x128xf32>
    %225 = vector.shape_cast %224 : vector<1x128xf32> to vector<128xf32>
    %226 = vector.shape_cast %225 : vector<128xf32> to vector<1x128xf32>
    %227 = vector.broadcast %226 : vector<1x128xf32> to vector<32x128xf32>
    %228 = arith.mulf %223, %227 : vector<32x128xf32>
    %229 = arith.addf %222, %228 : vector<32x128xf32>
    %c14 = arith.constant 14 : index
    %c0_52 = arith.constant 0 : index
    %230 = vector.load %arg10[%c14, %c0_52] : memref<64x128xf32, #tpu.memory_space<vmem>>, vector<32x128xf32>
    %231 = vector.extract_strided_slice %137 {offsets = [13, 0], sizes = [1, 128], strides = [1, 1]} : vector<31x128xf32> to vector<1x128xf32>
    %232 = vector.shape_cast %231 : vector<1x128xf32> to vector<128xf32>
    %233 = vector.shape_cast %232 : vector<128xf32> to vector<1x128xf32>
    %234 = vector.broadcast %233 : vector<1x128xf32> to vector<32x128xf32>
    %235 = arith.mulf %230, %234 : vector<32x128xf32>
    %236 = arith.addf %229, %235 : vector<32x128xf32>
    %c15 = arith.constant 15 : index
    %c0_53 = arith.constant 0 : index
    %237 = vector.load %arg10[%c15, %c0_53] : memref<64x128xf32, #tpu.memory_space<vmem>>, vector<32x128xf32>
    %238 = vector.extract_strided_slice %137 {offsets = [14, 0], sizes = [1, 128], strides = [1, 1]} : vector<31x128xf32> to vector<1x128xf32>
    %239 = vector.shape_cast %238 : vector<1x128xf32> to vector<128xf32>
    %240 = vector.shape_cast %239 : vector<128xf32> to vector<1x128xf32>
    %241 = vector.broadcast %240 : vector<1x128xf32> to vector<32x128xf32>
    %242 = arith.mulf %237, %241 : vector<32x128xf32>
    %243 = arith.addf %236, %242 : vector<32x128xf32>
    %c16_54 = arith.constant 16 : index
    %c0_55 = arith.constant 0 : index
    %244 = vector.load %arg10[%c16_54, %c0_55] : memref<64x128xf32, #tpu.memory_space<vmem>>, vector<32x128xf32>
    %245 = vector.extract_strided_slice %137 {offsets = [15, 0], sizes = [1, 128], strides = [1, 1]} : vector<31x128xf32> to vector<1x128xf32>
    %246 = vector.shape_cast %245 : vector<1x128xf32> to vector<128xf32>
    %247 = vector.shape_cast %246 : vector<128xf32> to vector<1x128xf32>
    %248 = vector.broadcast %247 : vector<1x128xf32> to vector<32x128xf32>
    %249 = arith.mulf %244, %248 : vector<32x128xf32>
    %250 = arith.addf %243, %249 : vector<32x128xf32>
    %c17 = arith.constant 17 : index
    %c0_56 = arith.constant 0 : index
    %251 = vector.load %arg10[%c17, %c0_56] : memref<64x128xf32, #tpu.memory_space<vmem>>, vector<32x128xf32>
    %252 = vector.extract_strided_slice %137 {offsets = [16, 0], sizes = [1, 128], strides = [1, 1]} : vector<31x128xf32> to vector<1x128xf32>
    %253 = vector.shape_cast %252 : vector<1x128xf32> to vector<128xf32>
    %254 = vector.shape_cast %253 : vector<128xf32> to vector<1x128xf32>
    %255 = vector.broadcast %254 : vector<1x128xf32> to vector<32x128xf32>
    %256 = arith.mulf %251, %255 : vector<32x128xf32>
    %257 = arith.addf %250, %256 : vector<32x128xf32>
    %c18 = arith.constant 18 : index
    %c0_57 = arith.constant 0 : index
    %258 = vector.load %arg10[%c18, %c0_57] : memref<64x128xf32, #tpu.memory_space<vmem>>, vector<32x128xf32>
    %259 = vector.extract_strided_slice %137 {offsets = [17, 0], sizes = [1, 128], strides = [1, 1]} : vector<31x128xf32> to vector<1x128xf32>
    %260 = vector.shape_cast %259 : vector<1x128xf32> to vector<128xf32>
    %261 = vector.shape_cast %260 : vector<128xf32> to vector<1x128xf32>
    %262 = vector.broadcast %261 : vector<1x128xf32> to vector<32x128xf32>
    %263 = arith.mulf %258, %262 : vector<32x128xf32>
    %264 = arith.addf %257, %263 : vector<32x128xf32>
    %c19 = arith.constant 19 : index
    %c0_58 = arith.constant 0 : index
    %265 = vector.load %arg10[%c19, %c0_58] : memref<64x128xf32, #tpu.memory_space<vmem>>, vector<32x128xf32>
    %266 = vector.extract_strided_slice %137 {offsets = [18, 0], sizes = [1, 128], strides = [1, 1]} : vector<31x128xf32> to vector<1x128xf32>
    %267 = vector.shape_cast %266 : vector<1x128xf32> to vector<128xf32>
    %268 = vector.shape_cast %267 : vector<128xf32> to vector<1x128xf32>
    %269 = vector.broadcast %268 : vector<1x128xf32> to vector<32x128xf32>
    %270 = arith.mulf %265, %269 : vector<32x128xf32>
    %271 = arith.addf %264, %270 : vector<32x128xf32>
    %c20 = arith.constant 20 : index
    %c0_59 = arith.constant 0 : index
    %272 = vector.load %arg10[%c20, %c0_59] : memref<64x128xf32, #tpu.memory_space<vmem>>, vector<32x128xf32>
    %273 = vector.extract_strided_slice %137 {offsets = [19, 0], sizes = [1, 128], strides = [1, 1]} : vector<31x128xf32> to vector<1x128xf32>
    %274 = vector.shape_cast %273 : vector<1x128xf32> to vector<128xf32>
    %275 = vector.shape_cast %274 : vector<128xf32> to vector<1x128xf32>
    %276 = vector.broadcast %275 : vector<1x128xf32> to vector<32x128xf32>
    %277 = arith.mulf %272, %276 : vector<32x128xf32>
    %278 = arith.addf %271, %277 : vector<32x128xf32>
    %c21 = arith.constant 21 : index
    %c0_60 = arith.constant 0 : index
    %279 = vector.load %arg10[%c21, %c0_60] : memref<64x128xf32, #tpu.memory_space<vmem>>, vector<32x128xf32>
    %280 = vector.extract_strided_slice %137 {offsets = [20, 0], sizes = [1, 128], strides = [1, 1]} : vector<31x128xf32> to vector<1x128xf32>
    %281 = vector.shape_cast %280 : vector<1x128xf32> to vector<128xf32>
    %282 = vector.shape_cast %281 : vector<128xf32> to vector<1x128xf32>
    %283 = vector.broadcast %282 : vector<1x128xf32> to vector<32x128xf32>
    %284 = arith.mulf %279, %283 : vector<32x128xf32>
    %285 = arith.addf %278, %284 : vector<32x128xf32>
    %c22 = arith.constant 22 : index
    %c0_61 = arith.constant 0 : index
    %286 = vector.load %arg10[%c22, %c0_61] : memref<64x128xf32, #tpu.memory_space<vmem>>, vector<32x128xf32>
    %287 = vector.extract_strided_slice %137 {offsets = [21, 0], sizes = [1, 128], strides = [1, 1]} : vector<31x128xf32> to vector<1x128xf32>
    %288 = vector.shape_cast %287 : vector<1x128xf32> to vector<128xf32>
    %289 = vector.shape_cast %288 : vector<128xf32> to vector<1x128xf32>
    %290 = vector.broadcast %289 : vector<1x128xf32> to vector<32x128xf32>
    %291 = arith.mulf %286, %290 : vector<32x128xf32>
    %292 = arith.addf %285, %291 : vector<32x128xf32>
    %c23 = arith.constant 23 : index
    %c0_62 = arith.constant 0 : index
    %293 = vector.load %arg10[%c23, %c0_62] : memref<64x128xf32, #tpu.memory_space<vmem>>, vector<32x128xf32>
    %294 = vector.extract_strided_slice %137 {offsets = [22, 0], sizes = [1, 128], strides = [1, 1]} : vector<31x128xf32> to vector<1x128xf32>
    %295 = vector.shape_cast %294 : vector<1x128xf32> to vector<128xf32>
    %296 = vector.shape_cast %295 : vector<128xf32> to vector<1x128xf32>
    %297 = vector.broadcast %296 : vector<1x128xf32> to vector<32x128xf32>
    %298 = arith.mulf %293, %297 : vector<32x128xf32>
    %299 = arith.addf %292, %298 : vector<32x128xf32>
    %c24 = arith.constant 24 : index
    %c0_63 = arith.constant 0 : index
    %300 = vector.load %arg10[%c24, %c0_63] : memref<64x128xf32, #tpu.memory_space<vmem>>, vector<32x128xf32>
    %301 = vector.extract_strided_slice %137 {offsets = [23, 0], sizes = [1, 128], strides = [1, 1]} : vector<31x128xf32> to vector<1x128xf32>
    %302 = vector.shape_cast %301 : vector<1x128xf32> to vector<128xf32>
    %303 = vector.shape_cast %302 : vector<128xf32> to vector<1x128xf32>
    %304 = vector.broadcast %303 : vector<1x128xf32> to vector<32x128xf32>
    %305 = arith.mulf %300, %304 : vector<32x128xf32>
    %306 = arith.addf %299, %305 : vector<32x128xf32>
    %c25 = arith.constant 25 : index
    %c0_64 = arith.constant 0 : index
    %307 = vector.load %arg10[%c25, %c0_64] : memref<64x128xf32, #tpu.memory_space<vmem>>, vector<32x128xf32>
    %308 = vector.extract_strided_slice %137 {offsets = [24, 0], sizes = [1, 128], strides = [1, 1]} : vector<31x128xf32> to vector<1x128xf32>
    %309 = vector.shape_cast %308 : vector<1x128xf32> to vector<128xf32>
    %310 = vector.shape_cast %309 : vector<128xf32> to vector<1x128xf32>
    %311 = vector.broadcast %310 : vector<1x128xf32> to vector<32x128xf32>
    %312 = arith.mulf %307, %311 : vector<32x128xf32>
    %313 = arith.addf %306, %312 : vector<32x128xf32>
    %c26 = arith.constant 26 : index
    %c0_65 = arith.constant 0 : index
    %314 = vector.load %arg10[%c26, %c0_65] : memref<64x128xf32, #tpu.memory_space<vmem>>, vector<32x128xf32>
    %315 = vector.extract_strided_slice %137 {offsets = [25, 0], sizes = [1, 128], strides = [1, 1]} : vector<31x128xf32> to vector<1x128xf32>
    %316 = vector.shape_cast %315 : vector<1x128xf32> to vector<128xf32>
    %317 = vector.shape_cast %316 : vector<128xf32> to vector<1x128xf32>
    %318 = vector.broadcast %317 : vector<1x128xf32> to vector<32x128xf32>
    %319 = arith.mulf %314, %318 : vector<32x128xf32>
    %320 = arith.addf %313, %319 : vector<32x128xf32>
    %c27 = arith.constant 27 : index
    %c0_66 = arith.constant 0 : index
    %321 = vector.load %arg10[%c27, %c0_66] : memref<64x128xf32, #tpu.memory_space<vmem>>, vector<32x128xf32>
    %322 = vector.extract_strided_slice %137 {offsets = [26, 0], sizes = [1, 128], strides = [1, 1]} : vector<31x128xf32> to vector<1x128xf32>
    %323 = vector.shape_cast %322 : vector<1x128xf32> to vector<128xf32>
    %324 = vector.shape_cast %323 : vector<128xf32> to vector<1x128xf32>
    %325 = vector.broadcast %324 : vector<1x128xf32> to vector<32x128xf32>
    %326 = arith.mulf %321, %325 : vector<32x128xf32>
    %327 = arith.addf %320, %326 : vector<32x128xf32>
    %c28 = arith.constant 28 : index
    %c0_67 = arith.constant 0 : index
    %328 = vector.load %arg10[%c28, %c0_67] : memref<64x128xf32, #tpu.memory_space<vmem>>, vector<32x128xf32>
    %329 = vector.extract_strided_slice %137 {offsets = [27, 0], sizes = [1, 128], strides = [1, 1]} : vector<31x128xf32> to vector<1x128xf32>
    %330 = vector.shape_cast %329 : vector<1x128xf32> to vector<128xf32>
    %331 = vector.shape_cast %330 : vector<128xf32> to vector<1x128xf32>
    %332 = vector.broadcast %331 : vector<1x128xf32> to vector<32x128xf32>
    %333 = arith.mulf %328, %332 : vector<32x128xf32>
    %334 = arith.addf %327, %333 : vector<32x128xf32>
    %c29 = arith.constant 29 : index
    %c0_68 = arith.constant 0 : index
    %335 = vector.load %arg10[%c29, %c0_68] : memref<64x128xf32, #tpu.memory_space<vmem>>, vector<32x128xf32>
    %336 = vector.extract_strided_slice %137 {offsets = [28, 0], sizes = [1, 128], strides = [1, 1]} : vector<31x128xf32> to vector<1x128xf32>
    %337 = vector.shape_cast %336 : vector<1x128xf32> to vector<128xf32>
    %338 = vector.shape_cast %337 : vector<128xf32> to vector<1x128xf32>
    %339 = vector.broadcast %338 : vector<1x128xf32> to vector<32x128xf32>
    %340 = arith.mulf %335, %339 : vector<32x128xf32>
    %341 = arith.addf %334, %340 : vector<32x128xf32>
    %c30 = arith.constant 30 : index
    %c0_69 = arith.constant 0 : index
    %342 = vector.load %arg10[%c30, %c0_69] : memref<64x128xf32, #tpu.memory_space<vmem>>, vector<32x128xf32>
    %343 = vector.extract_strided_slice %137 {offsets = [29, 0], sizes = [1, 128], strides = [1, 1]} : vector<31x128xf32> to vector<1x128xf32>
    %344 = vector.shape_cast %343 : vector<1x128xf32> to vector<128xf32>
    %345 = vector.shape_cast %344 : vector<128xf32> to vector<1x128xf32>
    %346 = vector.broadcast %345 : vector<1x128xf32> to vector<32x128xf32>
    %347 = arith.mulf %342, %346 : vector<32x128xf32>
    %348 = arith.addf %341, %347 : vector<32x128xf32>
    %c31 = arith.constant 31 : index
    %c0_70 = arith.constant 0 : index
    %349 = vector.load %arg10[%c31, %c0_70] : memref<64x128xf32, #tpu.memory_space<vmem>>, vector<32x128xf32>
    %350 = vector.extract_strided_slice %137 {offsets = [30, 0], sizes = [1, 128], strides = [1, 1]} : vector<31x128xf32> to vector<1x128xf32>
    %351 = vector.shape_cast %350 : vector<1x128xf32> to vector<128xf32>
    %352 = vector.shape_cast %351 : vector<128xf32> to vector<1x128xf32>
    %353 = vector.broadcast %352 : vector<1x128xf32> to vector<32x128xf32>
    %354 = arith.mulf %349, %353 : vector<32x128xf32>
    %355 = arith.addf %348, %354 : vector<32x128xf32>
    %356 = vector.broadcast %5 : vector<1x128xf32> to vector<32x128xf32>
    %357 = arith.addf %355, %356 : vector<32x128xf32>
    %358 = vector.broadcast %6 : vector<1x128xf32> to vector<32x128xf32>
    %359 = arith.mulf %357, %358 : vector<32x128xf32>
    %360 = vector.broadcast %7 : vector<1x128xf32> to vector<32x128xf32>
    %361 = arith.addf %359, %360 : vector<32x128xf32>
    %362 = arith.negf %361 : vector<32x128xf32>
    %363 = math.exp %362 : vector<32x128xf32>
    %cst_71 = arith.constant 1.000000e+00 : f32
    %364 = vector.broadcast %cst_71 : f32 to vector<32x128xf32>
    %365 = arith.addf %364, %363 : vector<32x128xf32>
    %366 = arith.divf %364, %365 : vector<32x128xf32>
    %367 = arith.mulf %361, %366 : vector<32x128xf32>
    %368 = arith.truncf %367 : vector<32x128xf32> to vector<32x128xbf16>
    %c0_72 = arith.constant 0 : index
    %c0_73 = arith.constant 0 : index
    %369 = vector.load %arg8[%c0_72, %c0_73] : memref<128x128xbf16, #tpu.memory_space<vmem>>, vector<128x128xbf16>
    %cst_74 = arith.constant dense<0.000000e+00> : vector<32x128xf32>
    %370 = tpu.matmul %368, %369, %cst_74 {dimension_numbers = #tpu.dot_dimension_numbers<[1], [0], [0], [1], [0, 0, 1, 1], [], []>} : vector<32x128xbf16>, vector<128x128xbf16>, vector<32x128xf32> -> vector<32x128xf32>
    %371 = vector.broadcast %8 : vector<1x128xf32> to vector<32x128xf32>
    %372 = arith.addf %370, %371 : vector<32x128xf32>
    %c0_75 = arith.constant 0 : index
    %c0_76 = arith.constant 0 : index
    %c0_77 = arith.constant 0 : index
    %373 = vector.load %arg2[%c0_75, %c0_76, %c0_77] : memref<1x32x128xf32, #tpu.memory_space<vmem>>, vector<1x32x128xf32>
    %374 = vector.shape_cast %373 : vector<1x32x128xf32> to vector<32x128xf32>
    %375 = arith.addf %372, %374 : vector<32x128xf32>
    %c0_78 = arith.constant 0 : index
    %c0_79 = arith.constant 0 : index
    %c0_80 = arith.constant 0 : index
    %376 = vector.load %arg9[%c0_78, %c0_79, %c0_80] : memref<1x32x128xf32, #tpu.memory_space<vmem>>, vector<1x32x128xf32>
    %377 = vector.shape_cast %376 : vector<1x32x128xf32> to vector<32x128xf32>
    %378 = vector.shape_cast %375 : vector<32x128xf32> to vector<1x32x128xf32>
    tpu.vector_store %arg9[%c0_78, %c0_79, %c0_80], %378 {strides = array<i32>} : memref<1x32x128xf32, #tpu.memory_space<vmem>>, vector<1x32x128xf32>,
    return
  }
  func.func @transform_0(%arg0: i32, %arg1: i32) -> (i32, i32, i32) {
    %c0_i32 = arith.constant 0 : i32
    %c0_i32_0 = arith.constant 0 : i32
    return %arg0, %arg1, %c0_i32 : i32, i32, i32
  }
  func.func @transform_1(%arg0: i32, %arg1: i32) -> (i32, i32, i32) {
    %c2_i32 = arith.constant 2 : i32
    %0 = arith.muli %arg1, %c2_i32 : i32
    %c1_i32 = arith.constant 1 : i32
    %1 = arith.subi %0, %c1_i32 : i32
    %c0_i32 = arith.constant 0 : i32
    %2 = arith.maxsi %1, %c0_i32 : i32
    %c0_i32_0 = arith.constant 0 : i32
    %c0_i32_1 = arith.constant 0 : i32
    return %arg0, %2, %c0_i32_0 : i32, i32, i32
  }
  func.func @transform_2(%arg0: i32, %arg1: i32) -> (i32, i32, i32) {
    %c1_i32 = arith.constant 1 : i32
    %0 = arith.addi %arg1, %c1_i32 : i32
    %c2_i32 = arith.constant 2 : i32
    %1 = arith.muli %0, %c2_i32 : i32
    %c3_i32 = arith.constant 3 : i32
    %2 = arith.minsi %1, %c3_i32 : i32
    %c0_i32 = arith.constant 0 : i32
    %c0_i32_0 = arith.constant 0 : i32
    return %arg0, %2, %c0_i32 : i32, i32, i32
  }
  func.func @transform_3(%arg0: i32, %arg1: i32) -> (i32, i32) {
    %c0_i32 = arith.constant 0 : i32
    %c0_i32_0 = arith.constant 0 : i32
    %c0_i32_1 = arith.constant 0 : i32
    return %c0_i32, %c0_i32_0 : i32, i32
  }
  func.func @transform_4(%arg0: i32, %arg1: i32) -> (i32, i32) {
    %c0_i32 = arith.constant 0 : i32
    %c0_i32_0 = arith.constant 0 : i32
    %c0_i32_1 = arith.constant 0 : i32
    return %c0_i32, %c0_i32_0 : i32, i32
  }
  func.func @transform_5(%arg0: i32, %arg1: i32) -> (i32, i32) {
    %c0_i32 = arith.constant 0 : i32
    %c0_i32_0 = arith.constant 0 : i32
    %c0_i32_1 = arith.constant 0 : i32
    return %c0_i32, %c0_i32_0 : i32, i32
  }
  func.func @transform_6(%arg0: i32, %arg1: i32) -> (i32, i32) {
    %c0_i32 = arith.constant 0 : i32
    %c0_i32_0 = arith.constant 0 : i32
    %c0_i32_1 = arith.constant 0 : i32
    return %c0_i32, %c0_i32_0 : i32, i32
  }
  func.func @transform_7(%arg0: i32, %arg1: i32) -> (i32, i32, i32) {
    %c0_i32 = arith.constant 0 : i32
    %c0_i32_0 = arith.constant 0 : i32
    return %arg0, %arg1, %c0_i32 : i32, i32, i32
  }
}

</mosaic_0001>

<llo_original>
// kernel: tpu_custom_call.1
$region0: #{tpu_custom_call.1}
  #allocation0 [shape = 'u32[]', space=smem, size = 0x4, offset = 0x4, fixed_abs, tag = 'smem constant byte address 0x4 - core index']
  #allocation1 [shape = 'u32[144,128]{1,0:T(1,128)}', space=vmem, size = 0x12000, scoped, tag = 'internal scratch']
  #allocation2 [shape = 'f32[64,128]{1,0:T(8,128)}', space=vmem, size = 0x8000, scoped, tag = 'scratch operand']
  %s0 = inlined_call_operand.hbm [shape: f32[2,64,128], index: 0, kind: input, shape index: {}]
  %s1 = inlined_call_operand.hbm [shape: f32[2,64,128], index: 1, kind: input, shape index: {}]
  %s2 = inlined_call_operand.hbm [shape: f32[2,64,128], index: 2, kind: input, shape index: {}]
  %s3 = inlined_call_operand.hbm [shape: f32[8,128], index: 3, kind: input, shape index: {}]
  %s4 = inlined_call_operand.hbm [shape: bf16[128,256], index: 4, kind: input, shape index: {}]
  %s5 = inlined_call_operand.hbm [shape: f32[31,128], index: 5, kind: input, shape index: {}]
  %s6 = inlined_call_operand.hbm [shape: bf16[128,128], index: 6, kind: input, shape index: {}]
  %s7 = inlined_call_operand.hbm [shape: f32[2,64,128], index: 7, kind: output, shape index: {}]
  %s8 = sld [smem:[#allocation0]]
  $region89: #{tpu_custom_call.1} parent=0
    _
  %s10 = ssub.s32 1, %s8
  %s11 = scalar_select 0, %s10, %s8
  $region1: #{tpu_custom_call.1} parent=0
    #allocation3 [shape = 'u8[32768]{0}', space=vmem, size = 0x8000, scoped, tag = 'input window, operand 0']
    #allocation4 [shape = 's32[2]{0}', space=sflag, size = 0x8, scoped, tag = 'scoped memory for tpu_custom_call.1']
    #allocation5 [shape = 's32[2]{0}', space=sflag, size = 0x8, scoped, tag = 'scoped memory for tpu_custom_call.1']
    #allocation6 [shape = 'u8[16384]{0}', space=vmem, size = 0x4000, scoped, tag = 'input window, operand 1']
    #allocation7 [shape = 's32[2]{0}', space=sflag, size = 0x8, scoped, tag = 'scoped memory for tpu_custom_call.1']
    #allocation8 [shape = 'u8[16384]{0}', space=vmem, size = 0x4000, scoped, tag = 'input window, operand 2']
    #allocation9 [shape = 'u8[4096]{0}', space=vmem, size = 0x1000, scoped, tag = 'input window, operand 3, single buffered']
    #allocation10 [shape = 's32[1]{0}', space=sflag, size = 0x4, scoped, tag = 'scoped memory for tpu_custom_call.1']
    #allocation11 [shape = 'u8[65536]{0}', space=vmem, size = 0x10000, scoped, tag = 'input window, operand 4, single buffered']
    #allocation12 [shape = 'u8[16384]{0}', space=vmem, size = 0x4000, scoped, tag = 'input window, operand 5, single buffered']
    #allocation13 [shape = 's32[1]{0}', space=sflag, size = 0x4, scoped, tag = 'scoped memory for tpu_custom_call.1']
    #allocation14 [shape = 'u8[32768]{0}', space=vmem, size = 0x8000, scoped, tag = 'input window, operand 6, single buffered']
    #allocation15 [shape = 'u8[32768]{0}', space=vmem, size = 0x8000, scoped, tag = 'output window, operand 0']
    %12 = vsyncpa [#allocation4], 0
    %s13 = scalar_lea.sflag [#allocation4], 1
    %14 = vsyncpa %s13, 0
    %15 = vsyncpa [#allocation7], 0
    %s16 = scalar_lea.sflag [#allocation7], 1
    %17 = vsyncpa %s16, 0
    %18 = vsyncpa [#allocation10], 0
    %19 = vsyncpa [#allocation13], 0
    %20 = vsyncpa [#allocation5], 0
    %s21 = scalar_lea.sflag [#allocation5], 1
    %22 = vsyncpa %s21, 0
    loop: start=0, step=1, limit=6
    $region2: #{tpu_custom_call.1} parent=1 // loop_pre_header
      _
    $region3: #{tpu_custom_call.1} parent=1 // loop_header
      %s24 = sphi 0, %s28
      %p25 = scmp.ge.s32.totalorder %s24, 6
      %s31 = sphi 0, %s43
      %s32 = sphi 0, %s39
      %s33 = sphi 0, %s31
      %s34 = sphi 0, %s32
      %s35 = sphi 0, %s33
      %s36 = sphi 0, %s34
      %s48 = sphi 0, %s50
      %s51 = sphi 0, %s48
      %s52 = sphi 0, %s51
      %s68 = sphi 0, %s52
      %s84 = sphi 0, %s86
      %s87 = sphi 0, %s84
      %s88 = sphi 0, %s87
      %s104 = sphi 0, %s88
      %s120 = sphi 0, %s122
      %s123 = sphi 0, %s120
      %s124 = sphi 0, %s123
      %s140 = sphi 0, %s124
      %s144 = sphi 0, %s144
      %s146 = sphi 0, %s144
      %s147 = sphi 0, %s146
      %s161 = sphi 0, %s147
      %s165 = sphi 0, %s165
      %s167 = sphi 0, %s165
      %s168 = sphi 0, %s167
      %s182 = sphi 0, %s168
      %s186 = sphi 0, %s186
      %s188 = sphi 0, %s186
      %s189 = sphi 0, %s188
      %s203 = sphi 0, %s189
      %s207 = sphi 0, %s207
      %s209 = sphi 0, %s207
      %s210 = sphi 0, %s209
      %s224 = sphi 0, %s210
      %s232 = sphi 0, %s234
      %s235 = sphi 0, %s232
      %s236 = sphi 0, %s235
      %s252 = sphi 0, %s236
    $region4: #{tpu_custom_call.1} parent=1 // loop_header_branch
      %27 = sbr.rel (%p25) target = $region8
    $region5: #{tpu_custom_call.1} parent=1 // loop_body
      %s29 = ssub.s32 %s24, 1
      %s30 = ssub.s32 %s24, 2
      %s37 = sadd.s32 1, %s32
      %p38 = scmp.ge.s32.totalorder %s37, 2
      %s39 = scalar_select %p38, 0, %s37
      %s40 = sadd.s32 1, %s31
      %s41 = scalar_select %p38, %s40, %s31
      %p42 = scmp.ge.s32.totalorder %s41, 2
      %s43 = scalar_select %p42, 0, %s41
      %s44 = ssub.s32 %s31, %s43
      %s45 = ssub.s32 %s32, %s39
      %s46 = sor.u32 %s44, %s45
      %p47 = scmp.eq.s32.totalorder %s46, 0
      %s49 = sadd.s32 %s48, 1
      %s50 = scalar_select %p47, %s48, %s49
      %p53 = pneg %p47
      %p54 = scmp.eq.s32.totalorder %s24, 3
      %p55 = por %p53, %p54
      %p56 = scmp.ne.s32.totalorder %s48, %s51
      %p57 = scmp.eq.s32.totalorder %s24, 0
      %p58 = por %p56, %p57
      %p59 = scmp.ne.s32.totalorder %s48, %s51
      %p60 = scmp.eq.s32.totalorder %s29, 3
      %p61 = por %p59, %p60
      %p62 = scmp.ne.s32.totalorder %s51, %s52
      %p63 = scmp.eq.s32.totalorder %s29, 0
      %p64 = por %p62, %p63
      %p65 = scmp.ne.s32.totalorder %s51, %s52
      %p66 = scmp.eq.s32.totalorder %s30, 3
      %p67 = por %p65, %p66
      %p69 = scmp.ne.s32.totalorder %s52, %s68
      %p70 = scmp.eq.s32.totalorder %s30, 0
      %p71 = por %p69, %p70
      %s72 = smul.u32 %s32, 2
      %s73 = ssub.s32 %s72, 1
      %p74 = scmp.gt.s32.totalorder %s73, 0
      %s75 = scalar_select %p74, %s73, 0
      %s76 = smul.u32 %s39, 2
      %s77 = ssub.s32 %s76, 1
      %p78 = scmp.gt.s32.totalorder %s77, 0
      %s79 = scalar_select %p78, %s77, 0
      %s80 = ssub.s32 %s31, %s43
      %s81 = ssub.s32 %s75, %s79
      %s82 = sor.u32 %s80, %s81
      %p83 = scmp.eq.s32.totalorder %s82, 0
      %s85 = sadd.s32 %s84, 1
      %s86 = scalar_select %p83, %s84, %s85
      %p89 = pneg %p83
      %p90 = scmp.eq.s32.totalorder %s24, 3
      %p91 = por %p89, %p90
      %p92 = scmp.ne.s32.totalorder %s84, %s87
      %p93 = scmp.eq.s32.totalorder %s24, 0
      %p94 = por %p92, %p93
      %p95 = scmp.ne.s32.totalorder %s84, %s87
      %p96 = scmp.eq.s32.totalorder %s29, 3
      %p97 = por %p95, %p96
      %p98 = scmp.ne.s32.totalorder %s87, %s88
      %p99 = scmp.eq.s32.totalorder %s29, 0
      %p100 = por %p98, %p99
      %p101 = scmp.ne.s32.totalorder %s87, %s88
      %p102 = scmp.eq.s32.totalorder %s30, 3
      %p103 = por %p101, %p102
      %p105 = scmp.ne.s32.totalorder %s88, %s104
      %p106 = scmp.eq.s32.totalorder %s30, 0
      %p107 = por %p105, %p106
      %s108 = sadd.s32 %s32, 1
      %s109 = smul.u32 %s108, 2
      %p110 = scmp.lt.s32.totalorder %s109, 3
      %s111 = scalar_select %p110, %s109, 3
      %s112 = sadd.s32 %s39, 1
      %s113 = smul.u32 %s112, 2
      %p114 = scmp.lt.s32.totalorder %s113, 3
      %s115 = scalar_select %p114, %s113, 3
      %s116 = ssub.s32 %s31, %s43
      %s117 = ssub.s32 %s111, %s115
      %s118 = sor.u32 %s116, %s117
      %p119 = scmp.eq.s32.totalorder %s118, 0
      %s121 = sadd.s32 %s120, 1
      %s122 = scalar_select %p119, %s120, %s121
      %p125 = pneg %p119
      %p126 = scmp.eq.s32.totalorder %s24, 3
      %p127 = por %p125, %p126
      %p128 = scmp.ne.s32.totalorder %s120, %s123
      %p129 = scmp.eq.s32.totalorder %s24, 0
      %p130 = por %p128, %p129
      %p131 = scmp.ne.s32.totalorder %s120, %s123
      %p132 = scmp.eq.s32.totalorder %s29, 3
      %p133 = por %p131, %p132
      %p134 = scmp.ne.s32.totalorder %s123, %s124
      %p135 = scmp.eq.s32.totalorder %s29, 0
      %p136 = por %p134, %p135
      %p137 = scmp.ne.s32.totalorder %s123, %s124
      %p138 = scmp.eq.s32.totalorder %s30, 3
      %p139 = por %p137, %p138
      %p141 = scmp.ne.s32.totalorder %s124, %s140
      %p142 = scmp.eq.s32.totalorder %s30, 0
      %p143 = por %p141, %p142
      %s145 = sadd.s32 %s144, 1
      %p148 = scmp.eq.s32.totalorder %s24, 3
      %p149 = scmp.ne.s32.totalorder %s144, %s146
      %p150 = scmp.eq.s32.totalorder %s24, 0
      %p151 = por %p149, %p150
      %p152 = scmp.ne.s32.totalorder %s144, %s146
      %p153 = scmp.eq.s32.totalorder %s29, 3
      %p154 = por %p152, %p153
      %p155 = scmp.ne.s32.totalorder %s146, %s147
      %p156 = scmp.eq.s32.totalorder %s29, 0
      %p157 = por %p155, %p156
      %p158 = scmp.ne.s32.totalorder %s146, %s147
      %p159 = scmp.eq.s32.totalorder %s30, 3
      %p160 = por %p158, %p159
      %p162 = scmp.ne.s32.totalorder %s147, %s161
      %p163 = scmp.eq.s32.totalorder %s30, 0
      %p164 = por %p162, %p163
      %s166 = sadd.s32 %s165, 1
      %p169 = scmp.eq.s32.totalorder %s24, 3
      %p170 = scmp.ne.s32.totalorder %s165, %s167
      %p171 = scmp.eq.s32.totalorder %s24, 0
      %p172 = por %p170, %p171
      %p173 = scmp.ne.s32.totalorder %s165, %s167
      %p174 = scmp.eq.s32.totalorder %s29, 3
      %p175 = por %p173, %p174
      %p176 = scmp.ne.s32.totalorder %s167, %s168
      %p177 = scmp.eq.s32.totalorder %s29, 0
      %p178 = por %p176, %p177
      %p179 = scmp.ne.s32.totalorder %s167, %s168
      %p180 = scmp.eq.s32.totalorder %s30, 3
      %p181 = por %p179, %p180
      %p183 = scmp.ne.s32.totalorder %s168, %s182
      %p184 = scmp.eq.s32.totalorder %s30, 0
      %p185 = por %p183, %p184
      %s187 = sadd.s32 %s186, 1
      %p190 = scmp.eq.s32.totalorder %s24, 3
      %p191 = scmp.ne.s32.totalorder %s186, %s188
      %p192 = scmp.eq.s32.totalorder %s24, 0
      %p193 = por %p191, %p192
      %p194 = scmp.ne.s32.totalorder %s186, %s188
      %p195 = scmp.eq.s32.totalorder %s29, 3
      %p196 = por %p194, %p195
      %p197 = scmp.ne.s32.totalorder %s188, %s189
      %p198 = scmp.eq.s32.totalorder %s29, 0
      %p199 = por %p197, %p198
      %p200 = scmp.ne.s32.totalorder %s188, %s189
      %p201 = scmp.eq.s32.totalorder %s30, 3
      %p202 = por %p200, %p201
      %p204 = scmp.ne.s32.totalorder %s189, %s203
      %p205 = scmp.eq.s32.totalorder %s30, 0
      %p206 = por %p204, %p205
      %s208 = sadd.s32 %s207, 1
      %p211 = scmp.eq.s32.totalorder %s24, 3
      %p212 = scmp.ne.s32.totalorder %s207, %s209
      %p213 = scmp.eq.s32.totalorder %s24, 0
      %p214 = por %p212, %p213
      %p215 = scmp.ne.s32.totalorder %s207, %s209
      %p216 = scmp.eq.s32.totalorder %s29, 3
      %p217 = por %p215, %p216
      %p218 = scmp.ne.s32.totalorder %s209, %s210
      %p219 = scmp.eq.s32.totalorder %s29, 0
      %p220 = por %p218, %p219
      %p221 = scmp.ne.s32.totalorder %s209, %s210
      %p222 = scmp.eq.s32.totalorder %s30, 3
      %p223 = por %p221, %p222
      %p225 = scmp.ne.s32.totalorder %s210, %s224
      %p226 = scmp.eq.s32.totalorder %s30, 0
      %p227 = por %p225, %p226
      %s228 = ssub.s32 %s31, %s43
      %s229 = ssub.s32 %s32, %s39
      %s230 = sor.u32 %s228, %s229
      %p231 = scmp.eq.s32.totalorder %s230, 0
      %s233 = sadd.s32 %s232, 1
      %s234 = scalar_select %p231, %s232, %s233
      %p237 = pneg %p231
      %p238 = scmp.eq.s32.totalorder %s24, 3
      %p239 = por %p237, %p238
      %p240 = scmp.ne.s32.totalorder %s232, %s235
      %p241 = scmp.eq.s32.totalorder %s24, 0
      %p242 = por %p240, %p241
      %p243 = scmp.ne.s32.totalorder %s232, %s235
      %p244 = scmp.eq.s32.totalorder %s29, 3
      %p245 = por %p243, %p244
      %p246 = scmp.ne.s32.totalorder %s235, %s236
      %p247 = scmp.eq.s32.totalorder %s29, 0
      %p248 = por %p246, %p247
      %p249 = scmp.ne.s32.totalorder %s235, %s236
      %p250 = scmp.eq.s32.totalorder %s30, 3
      %p251 = por %p249, %p250
      %p253 = scmp.ne.s32.totalorder %s236, %s252
      %p254 = scmp.eq.s32.totalorder %s30, 0
      %p255 = por %p253, %p254
      %p256 = scmp.le.s32.totalorder 1, %s24
      %p257 = scmp.lt.s32.totalorder %s24, 5
      %p258 = pnand %p256, %p257
      %p259 = pneg %p258
      // Predicated region
      $region9: #{tpu_custom_call.1} parent=5 // pred_check
        _
      $region10: #{tpu_custom_call.1} parent=5 // pred_check_branch
        %261 = sbr.rel (%p258) target = $region12
      $region11: #{tpu_custom_call.1} parent=5 // pred_region
        %s262 = ssub.s32 %s24, 1
        // Predicated region
        $region13: #{tpu_custom_call.1} parent=11 // pred_check
          %p263 = pneg %p157
        $region14: #{tpu_custom_call.1} parent=11 // pred_check_branch
          %265 = sbr.rel (%p263) target = $region16
        $region15: #{tpu_custom_call.1} parent=11 // pred_region
          %s267 = ssub.s32 128, 128
          %268 = vsyncadd [#allocation10], %s267
          %s270 = sshll.u32 [#allocation9], 4
          %s271 = int_to_ptr.vmem [resolvable:$true] %s270
          %273 = dma.hbm_to_vmem [thread:$0]  %s3, 128, %s271, [#allocation10]
        $region16: #{tpu_custom_call.1} parent=11 // pred_fallthru
          _
        // Predicated region
        $region17: #{tpu_custom_call.1} parent=11 // pred_check
          %p274 = pneg %p178
        $region18: #{tpu_custom_call.1} parent=11 // pred_check_branch
          %276 = sbr.rel (%p274) target = $region20
        $region19: #{tpu_custom_call.1} parent=11 // pred_region
          %s278 = ssub.s32 2048, 2048
          %279 = vsyncadd [#allocation10], %s278
          %s280 = sshll.u32 [#allocation11], 4
          %s281 = int_to_ptr.vmem [resolvable:$true] %s280
          %286 = dma.hbm_to_vmem [thread:$0]  %s4, 2048, %s281, [#allocation10], 128, 128, 8
        $region20: #{tpu_custom_call.1} parent=11 // pred_fallthru
          _
        // Predicated region
        $region21: #{tpu_custom_call.1} parent=11 // pred_check
          %p287 = pneg %p199
        $region22: #{tpu_custom_call.1} parent=11 // pred_check_branch
          %289 = sbr.rel (%p287) target = $region24
        $region23: #{tpu_custom_call.1} parent=11 // pred_region
          %s291 = ssub.s32 512, 512
          %292 = vsyncadd [#allocation13], %s291
          %s293 = sshll.u32 [#allocation12], 4
          %s294 = int_to_ptr.vmem [resolvable:$true] %s293
          %299 = dma.hbm_to_vmem [thread:$0]  %s5, 512, %s294, [#allocation13], 128, 128, 8
        $region24: #{tpu_custom_call.1} parent=11 // pred_fallthru
          _
        // Predicated region
        $region25: #{tpu_custom_call.1} parent=11 // pred_check
          %p300 = pneg %p220
        $region26: #{tpu_custom_call.1} parent=11 // pred_check_branch
          %302 = sbr.rel (%p300) target = $region28
        $region27: #{tpu_custom_call.1} parent=11 // pred_region
          %s304 = ssub.s32 1024, 1024
          %305 = vsyncadd [#allocation13], %s304
          %s306 = sshll.u32 [#allocation14], 4
          %s307 = int_to_ptr.vmem [resolvable:$true] %s306
          %312 = dma.hbm_to_vmem [thread:$0]  %s6, 1024, %s307, [#allocation13], 64, 64, 4
        $region28: #{tpu_custom_call.1} parent=11 // pred_fallthru
          _
      $region12: #{tpu_custom_call.1} parent=5 // pred_fallthru
        _
      %p313 = scmp.lt.s32.totalorder %s24, 4
      // Predicated region
      $region29: #{tpu_custom_call.1} parent=5 // pred_check
        %p314 = pneg %p313
      $region30: #{tpu_custom_call.1} parent=5 // pred_check_branch
        %316 = sbr.rel (%p314) target = $region32
      $region31: #{tpu_custom_call.1} parent=5 // pred_region
        // Predicated region
        $region33: #{tpu_custom_call.1} parent=31 // pred_check
          %p317 = pneg %p58
        $region34: #{tpu_custom_call.1} parent=31 // pred_check_branch
          %319 = sbr.rel (%p317) target = $region36
        $region35: #{tpu_custom_call.1} parent=31 // pred_region
          %s320 = sand.u32 %s48, 1
          %s321 = scalar_lea.sflag [#allocation4], %s320
          %s322 = sand.u32 %s48, 1
          %s323 = smul.addr %s322, 32
          %s324 = scalar_lea.vmem [#allocation3], %s323
          %s325 = smul.u32 4, %s32
          %s327 = ssub.s32 512, 512
          %328 = vsyncadd %s321, %s327
          %s329 = smul.addr %s31, 8
          %s330 = sadd.s32 %s325, %s329
          %s331 = smul.addr %s330, 128
          %s332 = scalar_lea.hbm %s0, %s331
          %s333 = sshll.u32 %s324, 4
          %s334 = int_to_ptr.vmem [resolvable:$true] %s333
          %339 = dma.hbm_to_vmem [thread:$0]  %s332, 512, %s334, %s321, 128, 128, 8
        $region36: #{tpu_custom_call.1} parent=31 // pred_fallthru
          _
        // Predicated region
        $region37: #{tpu_custom_call.1} parent=31 // pred_check
          %p340 = pneg %p94
        $region38: #{tpu_custom_call.1} parent=31 // pred_check_branch
          %342 = sbr.rel (%p340) target = $region40
        $region39: #{tpu_custom_call.1} parent=31 // pred_region
          %s343 = sand.u32 %s24, 1
          %s344 = scalar_lea.sflag [#allocation7], %s343
          %s345 = sand.u32 %s84, 1
          %s346 = smul.addr %s345, 16
          %s347 = scalar_lea.vmem [#allocation6], %s346
          %s348 = smul.u32 %s32, 2
          %s349 = ssub.s32 %s348, 1
          %p350 = scmp.gt.s32.totalorder %s349, 0
          %s351 = scalar_select %p350, %s349, 0
          %s352 = smul.u32 2, %s351
          %s354 = ssub.s32 256, 256
          %355 = vsyncadd %s344, %s354
          %s356 = smul.addr %s31, 8
          %s357 = sadd.s32 %s352, %s356
          %s358 = smul.addr %s357, 128
          %s359 = scalar_lea.hbm %s1, %s358
          %s360 = sshll.u32 %s347, 4
          %s361 = int_to_ptr.vmem [resolvable:$true] %s360
          %366 = dma.hbm_to_vmem [thread:$0]  %s359, 256, %s361, %s344, 128, 128, 8
        $region40: #{tpu_custom_call.1} parent=31 // pred_fallthru
          _
        // Predicated region
        $region41: #{tpu_custom_call.1} parent=31 // pred_check
          %p367 = pneg %p130
        $region42: #{tpu_custom_call.1} parent=31 // pred_check_branch
          %369 = sbr.rel (%p367) target = $region44
        $region43: #{tpu_custom_call.1} parent=31 // pred_region
          %s370 = sand.u32 %s24, 1
          %s371 = scalar_lea.sflag [#allocation7], %s370
          %s372 = sand.u32 %s120, 1
          %s373 = smul.addr %s372, 16
          %s374 = scalar_lea.vmem [#allocation8], %s373
          %s375 = sadd.s32 %s32, 1
          %s376 = smul.u32 %s375, 2
          %p377 = scmp.lt.s32.totalorder %s376, 3
          %s378 = scalar_select %p377, %s376, 3
          %s379 = smul.u32 2, %s378
          %s381 = ssub.s32 256, 256
          %382 = vsyncadd %s371, %s381
          %s383 = smul.addr %s31, 8
          %s384 = sadd.s32 %s379, %s383
          %s385 = smul.addr %s384, 128
          %s386 = scalar_lea.hbm %s2, %s385
          %s387 = sshll.u32 %s374, 4
          %s388 = int_to_ptr.vmem [resolvable:$true] %s387
          %393 = dma.hbm_to_vmem [thread:$0]  %s386, 256, %s388, %s371, 128, 128, 8
        $region44: #{tpu_custom_call.1} parent=31 // pred_fallthru
          _
      $region32: #{tpu_custom_call.1} parent=5 // pred_fallthru
        _
      %p394 = scmp.le.s32.totalorder 1, %s24
      %p395 = scmp.lt.s32.totalorder %s24, 5
      %p396 = pnand %p394, %p395
      %p397 = pneg %p396
      // Predicated region
      $region45: #{tpu_custom_call.1} parent=5 // pred_check
        _
      $region46: #{tpu_custom_call.1} parent=5 // pred_check_branch
        %399 = sbr.rel (%p396) target = $region48
      $region47: #{tpu_custom_call.1} parent=5 // pred_region
        %s400 = ssub.s32 %s24, 1
        %s401 = sand.u32 %s51, 1
        %s402 = scalar_lea.sflag [#allocation4], %s401
        %s403 = sand.u32 %s51, 1
        %s404 = smul.addr %s403, 32
        %s405 = scalar_lea.vmem [#allocation3], %s404
        // Predicated region
        $region49: #{tpu_custom_call.1} parent=47 // pred_check
          %p406 = pneg %p64
        $region50: #{tpu_custom_call.1} parent=47 // pred_check_branch
          %408 = sbr.rel (%p406) target = $region52
        $region51: #{tpu_custom_call.1} parent=47 // pred_region
          %409 = dma.done %s402, 512
        $region52: #{tpu_custom_call.1} parent=47 // pred_fallthru
          _
        %s410 = sand.u32 %s29, 1
        %s411 = scalar_lea.sflag [#allocation7], %s410
        %s412 = sand.u32 %s87, 1
        %s413 = smul.addr %s412, 16
        %s414 = scalar_lea.vmem [#allocation6], %s413
        // Predicated region
        $region53: #{tpu_custom_call.1} parent=47 // pred_check
          %p415 = pneg %p100
        $region54: #{tpu_custom_call.1} parent=47 // pred_check_branch
          %417 = sbr.rel (%p415) target = $region56
        $region55: #{tpu_custom_call.1} parent=47 // pred_region
          %418 = dma.done %s411, 256
        $region56: #{tpu_custom_call.1} parent=47 // pred_fallthru
          _
        %s419 = sand.u32 %s29, 1
        %s420 = scalar_lea.sflag [#allocation7], %s419
        %s421 = sand.u32 %s123, 1
        %s422 = smul.addr %s421, 16
        %s423 = scalar_lea.vmem [#allocation8], %s422
        // Predicated region
        $region57: #{tpu_custom_call.1} parent=47 // pred_check
          %p424 = pneg %p136
        $region58: #{tpu_custom_call.1} parent=47 // pred_check_branch
          %426 = sbr.rel (%p424) target = $region60
        $region59: #{tpu_custom_call.1} parent=47 // pred_region
          %427 = dma.done %s420, 256
        $region60: #{tpu_custom_call.1} parent=47 // pred_fallthru
          _
        // Predicated region
        $region61: #{tpu_custom_call.1} parent=47 // pred_check
          %p428 = pneg %p157
        $region62: #{tpu_custom_call.1} parent=47 // pred_check_branch
          %430 = sbr.rel (%p428) target = $region64
        $region63: #{tpu_custom_call.1} parent=47 // pred_region
          %431 = dma.done [#allocation10], 128
        $region64: #{tpu_custom_call.1} parent=47 // pred_fallthru
          _
        // Predicated region
        $region65: #{tpu_custom_call.1} parent=47 // pred_check
          %p432 = pneg %p178
        $region66: #{tpu_custom_call.1} parent=47 // pred_check_branch
          %434 = sbr.rel (%p432) target = $region68
        $region67: #{tpu_custom_call.1} parent=47 // pred_region
          %435 = dma.done [#allocation10], 2048
        $region68: #{tpu_custom_call.1} parent=47 // pred_fallthru
          _
        // Predicated region
        $region69: #{tpu_custom_call.1} parent=47 // pred_check
          %p436 = pneg %p199
        $region70: #{tpu_custom_call.1} parent=47 // pred_check_branch
          %438 = sbr.rel (%p436) target = $region72
        $region71: #{tpu_custom_call.1} parent=47 // pred_region
          %439 = dma.done [#allocation13], 512
        $region72: #{tpu_custom_call.1} parent=47 // pred_fallthru
          _
        // Predicated region
        $region73: #{tpu_custom_call.1} parent=47 // pred_check
          %p440 = pneg %p220
        $region74: #{tpu_custom_call.1} parent=47 // pred_check_branch
          %442 = sbr.rel (%p440) target = $region76
        $region75: #{tpu_custom_call.1} parent=47 // pred_region
          %443 = dma.done [#allocation13], 1024
        $region76: #{tpu_custom_call.1} parent=47 // pred_fallthru
          _
        %s444 = sand.u32 %s51, 1
        %s445 = scalar_lea.sflag [#allocation4], %s444
        %s446 = sand.u32 %s51, 1
        %s447 = smul.addr %s446, 32
        %s448 = scalar_lea.vmem [#allocation3], %s447
        %p449 = pneg %p64
        %p450 = pneg %p61
        %s451 = sand.u32 %s29, 1
        %s452 = scalar_lea.sflag [#allocation7], %s451
        %s453 = sand.u32 %s87, 1
        %s454 = smul.addr %s453, 16
        %s455 = scalar_lea.vmem [#allocation6], %s454
        %p456 = pneg %p100
        %p457 = pneg %p97
        %s458 = sand.u32 %s29, 1
        %s459 = scalar_lea.sflag [#allocation7], %s458
        %s460 = sand.u32 %s123, 1
        %s461 = smul.addr %s460, 16
        %s462 = scalar_lea.vmem [#allocation8], %s461
        %p463 = pneg %p136
        %p464 = pneg %p133
        %p465 = pneg %p157
        %p466 = pneg %p154
        %p467 = pneg %p178
        %p468 = pneg %p175
        %p469 = pneg %p199
        %p470 = pneg %p196
        %p471 = pneg %p220
        %p472 = pneg %p217
        %p473 = pneg %p248
        %p474 = pneg %p245
        %s475 = sand.u32 %s235, 1
        %s476 = scalar_lea.sflag [#allocation5], %s475
        %s477 = sand.u32 %s235, 1
        %s478 = smul.addr %s477, 32
        %s479 = scalar_lea.vmem [#allocation15], %s478
        %s480 = smul.u32 4, %s34
        %s481 = smul.u32 %s34, 2
        %s482 = ssub.s32 %s481, 1
        %p483 = scmp.gt.s32.totalorder %s482, 0
        %s484 = scalar_select %p483, %s482, 0
        %s485 = smul.u32 2, %s484
        %s486 = sadd.s32 %s34, 1
        %s487 = smul.u32 %s486, 2
        %p488 = scmp.lt.s32.totalorder %s487, 3
        %s489 = scalar_select %p488, %s487, 3
        %s490 = smul.u32 2, %s489
        %s491 = smul.u32 4, %s34
        %v493 = vld [vmem:[#allocation9] sm:$0xff]
        %v494 = vld [vmem:[#allocation11] sm:$0xff]
        %v495 = vld [vmem:[#allocation11 + $0x8] sm:$0xff]
        %v496 = vld [vmem:[#allocation11 + $0x10] sm:$0xff]
        %v497 = vld [vmem:[#allocation11 + $0x18] sm:$0xff]
        %v498 = vld [vmem:[#allocation11 + $0x20] sm:$0xff]
        %v499 = vld [vmem:[#allocation11 + $0x28] sm:$0xff]
        %v500 = vld [vmem:[#allocation11 + $0x30] sm:$0xff]
        %v501 = vld [vmem:[#allocation11 + $0x38] sm:$0xff]
        %v502 = vld [vmem:[#allocation11 + $0x40] sm:$0xff]
        %v503 = vld [vmem:[#allocation11 + $0x48] sm:$0xff]
        %v504 = vld [vmem:[#allocation11 + $0x50] sm:$0xff]
        %v505 = vld [vmem:[#allocation11 + $0x58] sm:$0xff]
        %v506 = vld [vmem:[#allocation11 + $0x60] sm:$0xff]
        %v507 = vld [vmem:[#allocation11 + $0x68] sm:$0xff]
        %v508 = vld [vmem:[#allocation11 + $0x70] sm:$0xff]
        %v509 = vld [vmem:[#allocation11 + $0x78] sm:$0xff]
        %v510 = vld [vmem:[%s405] sm:$0xff]
        %v511 = vld [vmem:[%s405 + $0x8] sm:$0xff]
        %v512 = vld [vmem:[%s405 + $0x10] sm:$0xff]
        %v513 = vld [vmem:[%s405 + $0x18] sm:$0xff]
        %514 = vadd.xlane.f32.xlu0 %v510
        %v515 = vpop.xlane.xlu0 %514
        %516 = vadd.xlane.f32.xlu0 %v511
        %v517 = vpop.xlane.xlu0 %516
        %518 = vadd.xlane.f32.xlu0 %v512
        %v519 = vpop.xlane.xlu0 %518
        %520 = vadd.xlane.f32.xlu0 %v513
        %v521 = vpop.xlane.xlu0 %520
        %v522 = vrcp.pop 128.0
        %v523 = vmul.f32 %v515, %v522
        %v524 = vmul.f32 %v517, %v522
        %v525 = vmul.f32 %v519, %v522
        %v526 = vmul.f32 %v521, %v522
        %v527 = vsub.f32 %v510, %v523
        %v528 = vsub.f32 %v511, %v524
        %v529 = vsub.f32 %v512, %v525
        %v530 = vsub.f32 %v513, %v526
        %v531 = vmul.f32 %v527, %v527
        %v532 = vmul.f32 %v528, %v528
        %v533 = vmul.f32 %v529, %v529
        %v534 = vmul.f32 %v530, %v530
        %535 = vadd.xlane.f32.xlu0 %v531
        %v536 = vpop.xlane.xlu0 %535
        %537 = vadd.xlane.f32.xlu0 %v532
        %v538 = vpop.xlane.xlu0 %537
        %539 = vadd.xlane.f32.xlu0 %v533
        %v540 = vpop.xlane.xlu0 %539
        %541 = vadd.xlane.f32.xlu0 %v534
        %v542 = vpop.xlane.xlu0 %541
        %v543 = vmul.f32 %v536, %v522
        %v544 = vmul.f32 %v538, %v522
        %v545 = vmul.f32 %v540, %v522
        %v546 = vmul.f32 %v542, %v522
        %v547 = vadd.f32 %v543, 1e-05
        %v548 = vadd.f32 %v544, 1e-05
        %v549 = vadd.f32 %v545, 1e-05
        %v550 = vadd.f32 %v546, 1e-05
        %v551 = vrsqrt.pop %v547
        %v552 = vrsqrt.pop %v548
        %v553 = vrsqrt.pop %v549
        %v554 = vrsqrt.pop %v550
        %v555 = vmul.f32 %v527, %v551
        %v556 = vmul.f32 %v528, %v552
        %v557 = vmul.f32 %v529, %v553
        %v558 = vmul.f32 %v530, %v554
        %v559 = vlaneseq
        %v560 = vshrl.u32 %v559, 7
        %v561 = vsub.s32 0, %v560
        %v562 = vrot.slane %v493, %v561
        %v563 = vmul.f32 %v555, %v562
        %v564 = vmul.f32 %v556, %v562
        %v565 = vmul.f32 %v557, %v562
        %v566 = vmul.f32 %v558, %v562
        %v567 = vlaneseq
        %v568 = vshrl.u32 %v567, 7
        %v569 = vsub.s32 1, %v568
        %v570 = vrot.slane %v493, %v569
        %v571 = vadd.f32 %v563, %v570
        %v572 = vadd.f32 %v564, %v570
        %v573 = vadd.f32 %v565, %v570
        %v574 = vadd.f32 %v566, %v570
        %v575 = vpack.c.bf16 %v572, %v571
        %v576 = vpack.c.bf16 %v574, %v573
        %v593 = vunpack.c.l.b16 %v494
        %v594 = vunpack.c.h.b16 %v494
        %v595 = vunpack.c.l.b16 %v495
        %v596 = vunpack.c.h.b16 %v495
        %v597 = vunpack.c.l.b16 %v496
        %v598 = vunpack.c.h.b16 %v496
        %v599 = vunpack.c.l.b16 %v497
        %v600 = vunpack.c.h.b16 %v497
        %v601 = vunpack.c.l.b16 %v498
        %v602 = vunpack.c.h.b16 %v498
        %v603 = vunpack.c.l.b16 %v499
        %v604 = vunpack.c.h.b16 %v499
        %v605 = vunpack.c.l.b16 %v500
        %v606 = vunpack.c.h.b16 %v500
        %v607 = vunpack.c.l.b16 %v501
        %v608 = vunpack.c.h.b16 %v501
        %v609 = vunpack.c.l.b16 %v502
        %v610 = vunpack.c.h.b16 %v502
        %v611 = vunpack.c.l.b16 %v503
        %v612 = vunpack.c.h.b16 %v503
        %v613 = vunpack.c.l.b16 %v504
        %v614 = vunpack.c.h.b16 %v504
        %v615 = vunpack.c.l.b16 %v505
        %v616 = vunpack.c.h.b16 %v505
        %v617 = vunpack.c.l.b16 %v506
        %v618 = vunpack.c.h.b16 %v506
        %v619 = vunpack.c.l.b16 %v507
        %v620 = vunpack.c.h.b16 %v507
        %v621 = vunpack.c.l.b16 %v508
        %v622 = vunpack.c.h.b16 %v508
        %v623 = vunpack.c.l.b16 %v509
        %v624 = vunpack.c.h.b16 %v509
        %v625 = vpack.c.b16 %v595, %v593
        %v626 = vpack.c.b16 %v596, %v594
        %v627 = vpack.c.b16 %v599, %v597
        %v628 = vpack.c.b16 %v600, %v598
        %v629 = vpack.c.b16 %v603, %v601
        %v630 = vpack.c.b16 %v604, %v602
        %v631 = vpack.c.b16 %v607, %v605
        %v632 = vpack.c.b16 %v608, %v606
        %v633 = vpack.c.b16 %v611, %v609
        %v634 = vpack.c.b16 %v612, %v610
        %v635 = vpack.c.b16 %v615, %v613
        %v636 = vpack.c.b16 %v616, %v614
        %v637 = vpack.c.b16 %v619, %v617
        %v638 = vpack.c.b16 %v620, %v618
        %v639 = vpack.c.b16 %v623, %v621
        %v640 = vpack.c.b16 %v624, %v622
        %657 = vmatprep.subr.bf16.mxu0 %v640
        %658 = vmatpush1.bf16.msra.mxu0 %v639
        %659 = vmatprep.subr.bf16.mxu0 %v638
        %660 = vmatpush1.bf16.msra.mxu0 %v637
        %661 = vmatprep.subr.bf16.mxu0 %v636
        %662 = vmatpush1.bf16.msra.mxu0 %v635
        %663 = vmatprep.subr.bf16.mxu0 %v634
        %664 = vmatpush1.bf16.msra.mxu0 %v633
        %665 = vmatprep.subr.bf16.mxu0 %v632
        %666 = vmatpush1.bf16.msra.mxu0 %v631
        %667 = vmatprep.subr.bf16.mxu0 %v630
        %668 = vmatpush1.bf16.msra.mxu0 %v629
        %669 = vmatprep.subr.bf16.mxu0 %v628
        %670 = vmatpush1.bf16.msra.mxu0 %v627
        %671 = vmatprep.subr.bf16.mxu0 %v626
        %672 = vmatpush1.bf16.msra.mxu0 %v625
        %673 = vmatprep.subr.bf16.mxu0 0
        %674 = vmatpush2.bf16.msra.mxu0 0
        %675 = vmatprep.subr.bf16.mxu0 0
        %676 = vmatpush2.bf16.msra.mxu0 0
        %677 = vmatprep.subr.bf16.mxu0 0
        %678 = vmatpush2.bf16.msra.mxu0 0
        %679 = vmatprep.subr.bf16.mxu0 0
        %680 = vmatpush2.bf16.msra.mxu0 0
        %681 = vmatprep.subr.bf16.mxu0 0
        %682 = vmatpush2.bf16.msra.mxu0 0
        %683 = vmatprep.subr.bf16.mxu0 0
        %684 = vmatpush2.bf16.msra.mxu0 0
        %685 = vmatprep.subr.bf16.mxu0 0
        %686 = vmatpush2.bf16.msra.mxu0 0
        %687 = vmatprep.subr.bf16.mxu0 0
        %688 = vmatpush2.bf16.msra.mxu0 0
        %689 = vmatprep.mubr.bf16.mxu0 0
        %690 = vmatmul.mubr.bf16.gmra.mxu0 %v575
        %v691 = vpop.f32.mrf.mxu0
        %v692 = vadd.f32 0.0, %v691
        %v693 = vpop.f32.mrf.mxu0
        %v694 = vadd.f32 0.0, %v693
        %v695 = vpop.f32.mrf.mxu0
        %v696 = vadd.f32 0.0, %v695
        %v697 = vpop.f32.mrf.mxu0
        %v698 = vadd.f32 0.0, %v697
        %699 = vmatprep.mubr.bf16.mxu0 0
        %700 = vmatmul.mubr.bf16.gmra.mxu0 %v576
        %v701 = vpop.f32.mrf.mxu0
        %v702 = vadd.f32 0.0, %v701
        %v703 = vpop.f32.mrf.mxu0
        %v704 = vadd.f32 0.0, %v703
        %v705 = vpop.f32.mrf.mxu0
        %v706 = vadd.f32 0.0, %v705
        %v707 = vpop.f32.mrf.mxu0
        %v708 = vadd.f32 0.0, %v707
        %709 = vdwg.mxu0
        %v710 = vlaneseq
        %v711 = vshrl.u32 %v710, 7
        %v712 = vsub.s32 2, %v711
        %v713 = vrot.slane %v493, %v712
        %v714 = vadd.f32 %v692, %v713
        %v715 = vadd.f32 %v696, %v713
        %v716 = vadd.f32 %v702, %v713
        %v717 = vadd.f32 %v706, %v713
        %v718 = vlaneseq
        %v719 = vshrl.u32 %v718, 7
        %v720 = vsub.s32 3, %v719
        %v721 = vrot.slane %v493, %v720
        %v722 = vadd.f32 %v694, %v721
        %v723 = vadd.f32 %v698, %v721
        %v724 = vadd.f32 %v704, %v721
        %v725 = vadd.f32 %v708, %v721
        %v726 = vxor.u32 %v722, 2147483648
        %v727 = vxor.u32 %v723, 2147483648
        %v728 = vxor.u32 %v724, 2147483648
        %v729 = vxor.u32 %v725, 2147483648
        %v730 = vmul.f32 %v726, 1.442695
        %v731 = vpow.pop %v730
        %v732 = vmul.f32 %v727, 1.442695
        %v733 = vpow.pop %v732
        %v734 = vmul.f32 %v728, 1.442695
        %v735 = vpow.pop %v734
        %v736 = vmul.f32 %v729, 1.442695
        %v737 = vpow.pop %v736
        %v738 = vadd.f32 %v731, 1.0
        %v739 = vadd.f32 %v733, 1.0
        %v740 = vadd.f32 %v735, 1.0
        %v741 = vadd.f32 %v737, 1.0
        %v742 = vrcp.pop %v738
        %v743 = vmul.f32 1.0, %v742
        %v744 = vrcp.pop %v739
        %v745 = vmul.f32 1.0, %v744
        %v746 = vrcp.pop %v740
        %v747 = vmul.f32 1.0, %v746
        %v748 = vrcp.pop %v741
        %v749 = vmul.f32 1.0, %v748
        %v750 = vmul.f32 %v714, %v743
        %v751 = vmul.f32 %v715, %v745
        %v752 = vmul.f32 %v716, %v747
        %v753 = vmul.f32 %v717, %v749
        %p754 = scmp.gt.s32.totalorder %s34, 0
        %s755 = scalar_select %p754, 1, 0
        %s756 = scvt.s32.f32 %s755
        %p757 = scmp.lt.s32.totalorder %s34, 1
        %s758 = scalar_select %p757, 1, 0
        %s759 = scvt.s32.f32 %s758
        %v760 = vld [vmem:[%s414] sm:$0xff]
        %v761 = vld [vmem:[%s414 + $0x8] sm:$0xff]
        %762 = vadd.xlane.f32.xlu0 %v760
        %v763 = vpop.xlane.xlu0 %762
        %764 = vadd.xlane.f32.xlu0 %v761
        %v765 = vpop.xlane.xlu0 %764
        %v766 = vmul.f32 %v763, %v522
        %v767 = vmul.f32 %v765, %v522
        %v768 = vsub.f32 %v760, %v766
        %v769 = vsub.f32 %v761, %v767
        %v770 = vmul.f32 %v768, %v768
        %v771 = vmul.f32 %v769, %v769
        %772 = vadd.xlane.f32.xlu0 %v770
        %v773 = vpop.xlane.xlu0 %772
        %774 = vadd.xlane.f32.xlu0 %v771
        %v775 = vpop.xlane.xlu0 %774
        %v776 = vmul.f32 %v773, %v522
        %v777 = vmul.f32 %v775, %v522
        %v778 = vadd.f32 %v776, 1e-05
        %v779 = vadd.f32 %v777, 1e-05
        %v780 = vrsqrt.pop %v778
        %v781 = vrsqrt.pop %v779
        %v782 = vmul.f32 %v768, %v780
        %v783 = vmul.f32 %v769, %v781
        %v784 = vmul.f32 %v782, %v562
        %v785 = vmul.f32 %v783, %v562
        %v786 = vadd.f32 %v784, %v570
        %v787 = vadd.f32 %v785, %v570
        %v788 = vpack.c.bf16 %v787, %v786
        %789 = vmatprep.subr.bf16.mxu0 %v640
        %790 = vmatpush1.bf16.msra.mxu0 %v639
        %791 = vmatprep.subr.bf16.mxu0 %v638
        %792 = vmatpush1.bf16.msra.mxu0 %v637
        %793 = vmatprep.subr.bf16.mxu0 %v636
        %794 = vmatpush1.bf16.msra.mxu0 %v635
        %795 = vmatprep.subr.bf16.mxu0 %v634
        %796 = vmatpush1.bf16.msra.mxu0 %v633
        %797 = vmatprep.subr.bf16.mxu0 %v632
        %798 = vmatpush1.bf16.msra.mxu0 %v631
        %799 = vmatprep.subr.bf16.mxu0 %v630
        %800 = vmatpush1.bf16.msra.mxu0 %v629
        %801 = vmatprep.subr.bf16.mxu0 %v628
        %802 = vmatpush1.bf16.msra.mxu0 %v627
        %803 = vmatprep.subr.bf16.mxu0 %v626
        %804 = vmatpush1.bf16.msra.mxu0 %v625
        %805 = vmatprep.subr.bf16.mxu0 0
        %806 = vmatpush2.bf16.msra.mxu0 0
        %807 = vmatprep.subr.bf16.mxu0 0
        %808 = vmatpush2.bf16.msra.mxu0 0
        %809 = vmatprep.subr.bf16.mxu0 0
        %810 = vmatpush2.bf16.msra.mxu0 0
        %811 = vmatprep.subr.bf16.mxu0 0
        %812 = vmatpush2.bf16.msra.mxu0 0
        %813 = vmatprep.subr.bf16.mxu0 0
        %814 = vmatpush2.bf16.msra.mxu0 0
        %815 = vmatprep.subr.bf16.mxu0 0
        %816 = vmatpush2.bf16.msra.mxu0 0
        %817 = vmatprep.subr.bf16.mxu0 0
        %818 = vmatpush2.bf16.msra.mxu0 0
        %819 = vmatprep.subr.bf16.mxu0 0
        %820 = vmatpush2.bf16.msra.mxu0 0
        %821 = vmatprep.mubr.bf16.mxu0 0
        %822 = vmatmul.mubr.bf16.gmra.mxu0 %v788
        %v823 = vpop.f32.mrf.mxu0
        %v824 = vadd.f32 0.0, %v823
        %v825 = vpop.f32.mrf.mxu0
        %v826 = vadd.f32 0.0, %v825
        %v827 = vpop.f32.mrf.mxu0
        %v828 = vadd.f32 0.0, %v827
        %v829 = vpop.f32.mrf.mxu0
        %v830 = vadd.f32 0.0, %v829
        %831 = vdwg.mxu0
        %v832 = vadd.f32 %v824, %v713
        %v833 = vadd.f32 %v828, %v713
        %v834 = vadd.f32 %v826, %v721
        %v835 = vadd.f32 %v830, %v721
        %v836 = vxor.u32 %v834, 2147483648
        %v837 = vxor.u32 %v835, 2147483648
        %v838 = vmul.f32 %v836, 1.442695
        %v839 = vpow.pop %v838
        %v840 = vmul.f32 %v837, 1.442695
        %v841 = vpow.pop %v840
        %v842 = vadd.f32 %v839, 1.0
        %v843 = vadd.f32 %v841, 1.0
        %v844 = vrcp.pop %v842
        %v845 = vmul.f32 1.0, %v844
        %v846 = vrcp.pop %v843
        %v847 = vmul.f32 1.0, %v846
        %v848 = vmul.f32 %v832, %v845
        %v849 = vmul.f32 %v833, %v847
        %v850 = vstv %s756
        %v851 = vmul.f32 %v848, %v850
        %v852 = vmul.f32 %v849, %v850
        %v853 = vld [vmem:[%s423] sm:$0xff]
        %v854 = vld [vmem:[%s423 + $0x8] sm:$0xff]
        %855 = vadd.xlane.f32.xlu0 %v853
        %v856 = vpop.xlane.xlu0 %855
        %857 = vadd.xlane.f32.xlu0 %v854
        %v858 = vpop.xlane.xlu0 %857
        %v859 = vmul.f32 %v856, %v522
        %v860 = vmul.f32 %v858, %v522
        %v861 = vsub.f32 %v853, %v859
        %v862 = vsub.f32 %v854, %v860
        %v863 = vmul.f32 %v861, %v861
        %v864 = vmul.f32 %v862, %v862
        %865 = vadd.xlane.f32.xlu0 %v863
        %v866 = vpop.xlane.xlu0 %865
        %867 = vadd.xlane.f32.xlu0 %v864
        %v868 = vpop.xlane.xlu0 %867
        %v869 = vmul.f32 %v866, %v522
        %v870 = vmul.f32 %v868, %v522
        %v871 = vadd.f32 %v869, 1e-05
        %v872 = vadd.f32 %v870, 1e-05
        %v873 = vrsqrt.pop %v871
        %v874 = vrsqrt.pop %v872
        %v875 = vmul.f32 %v861, %v873
        %v876 = vmul.f32 %v862, %v874
        %v877 = vmul.f32 %v875, %v562
        %v878 = vmul.f32 %v876, %v562
        %v879 = vadd.f32 %v877, %v570
        %v880 = vadd.f32 %v878, %v570
        %v881 = vpack.c.bf16 %v880, %v879
        %882 = vmatprep.subr.bf16.mxu0 %v640
        %883 = vmatpush1.bf16.msra.mxu0 %v639
        %884 = vmatprep.subr.bf16.mxu0 %v638
        %885 = vmatpush1.bf16.msra.mxu0 %v637
        %886 = vmatprep.subr.bf16.mxu0 %v636
        %887 = vmatpush1.bf16.msra.mxu0 %v635
        %888 = vmatprep.subr.bf16.mxu0 %v634
        %889 = vmatpush1.bf16.msra.mxu0 %v633
        %890 = vmatprep.subr.bf16.mxu0 %v632
        %891 = vmatpush1.bf16.msra.mxu0 %v631
        %892 = vmatprep.subr.bf16.mxu0 %v630
        %893 = vmatpush1.bf16.msra.mxu0 %v629
        %894 = vmatprep.subr.bf16.mxu0 %v628
        %895 = vmatpush1.bf16.msra.mxu0 %v627
        %896 = vmatprep.subr.bf16.mxu0 %v626
        %897 = vmatpush1.bf16.msra.mxu0 %v625
        %898 = vmatprep.subr.bf16.mxu0 0
        %899 = vmatpush2.bf16.msra.mxu0 0
        %900 = vmatprep.subr.bf16.mxu0 0
        %901 = vmatpush2.bf16.msra.mxu0 0
        %902 = vmatprep.subr.bf16.mxu0 0
        %903 = vmatpush2.bf16.msra.mxu0 0
        %904 = vmatprep.subr.bf16.mxu0 0
        %905 = vmatpush2.bf16.msra.mxu0 0
        %906 = vmatprep.subr.bf16.mxu0 0
        %907 = vmatpush2.bf16.msra.mxu0 0
        %908 = vmatprep.subr.bf16.mxu0 0
        %909 = vmatpush2.bf16.msra.mxu0 0
        %910 = vmatprep.subr.bf16.mxu0 0
        %911 = vmatpush2.bf16.msra.mxu0 0
        %912 = vmatprep.subr.bf16.mxu0 0
        %913 = vmatpush2.bf16.msra.mxu0 0
        %914 = vmatprep.mubr.bf16.mxu0 0
        %915 = vmatmul.mubr.bf16.gmra.mxu0 %v881
        %v916 = vpop.f32.mrf.mxu0
        %v917 = vadd.f32 0.0, %v916
        %v918 = vpop.f32.mrf.mxu0
        %v919 = vadd.f32 0.0, %v918
        %v920 = vpop.f32.mrf.mxu0
        %v921 = vadd.f32 0.0, %v920
        %v922 = vpop.f32.mrf.mxu0
        %v923 = vadd.f32 0.0, %v922
        %924 = vdwg.mxu0
        %v925 = vadd.f32 %v917, %v713
        %v926 = vadd.f32 %v921, %v713
        %v927 = vadd.f32 %v919, %v721
        %v928 = vadd.f32 %v923, %v721
        %v929 = vxor.u32 %v927, 2147483648
        %v930 = vxor.u32 %v928, 2147483648
        %v931 = vmul.f32 %v929, 1.442695
        %v932 = vpow.pop %v931
        %v933 = vmul.f32 %v930, 1.442695
        %v934 = vpow.pop %v933
        %v935 = vadd.f32 %v932, 1.0
        %v936 = vadd.f32 %v934, 1.0
        %v937 = vrcp.pop %v935
        %v938 = vmul.f32 1.0, %v937
        %v939 = vrcp.pop %v936
        %v940 = vmul.f32 1.0, %v939
        %v941 = vmul.f32 %v925, %v938
        %v942 = vmul.f32 %v926, %v940
        %v943 = vstv %s759
        %v944 = vmul.f32 %v941, %v943
        %v945 = vmul.f32 %v942, %v943
        %946 = vst [vmem:[#allocation2] sm:$0xff] %v851
        %947 = vst [vmem:[#allocation2 + $0x8] sm:$0xff] %v852
        %948 = vst [vmem:[#allocation2 + $0x10] sm:$0xff] %v750
        %949 = vst [vmem:[#allocation2 + $0x18] sm:$0xff] %v751
        %950 = vst [vmem:[#allocation2 + $0x20] sm:$0xff] %v752
        %951 = vst [vmem:[#allocation2 + $0x28] sm:$0xff] %v753
        %952 = vst [vmem:[#allocation2 + $0x30] sm:$0xff] %v944
        %953 = vst [vmem:[#allocation2 + $0x38] sm:$0xff] %v945
        %v954 = vld [vmem:[#allocation12] sm:$0xff]
        %v955 = vld [vmem:[#allocation12 + $0x8] sm:$0xff]
        %v956 = vld [vmem:[#allocation12 + $0x10] sm:$0xff]
        %v957 = vld [vmem:[#allocation12 + $0x18] sm:$0x7f]
        %v958 = vld [vmem:[#allocation2 + $0x1] sm:$0xff]
        %v959 = vld [vmem:[#allocation2 + $0x9] sm:$0xff]
        %v960 = vld [vmem:[#allocation2 + $0x11] sm:$0xff]
        %v961 = vld [vmem:[#allocation2 + $0x19] sm:$0xff]
        %v962 = vlaneseq
        %v963 = vshrl.u32 %v962, 7
        %v964 = vsub.s32 0, %v963
        %v965 = vrot.slane %v954, %v964
        %v966 = vmul.f32 %v958, %v965
        %v967 = vmul.f32 %v959, %v965
        %v968 = vmul.f32 %v960, %v965
        %v969 = vmul.f32 %v961, %v965
        %v970 = vadd.f32 %v966, 0.0
        %v971 = vadd.f32 %v967, 0.0
        %v972 = vadd.f32 %v968, 0.0
        %v973 = vadd.f32 %v969, 0.0
        %v974 = vld [vmem:[#allocation2 + $0x2] sm:$0xff]
        %v975 = vld [vmem:[#allocation2 + $0xa] sm:$0xff]
        %v976 = vld [vmem:[#allocation2 + $0x12] sm:$0xff]
        %v977 = vld [vmem:[#allocation2 + $0x1a] sm:$0xff]
        %v978 = vlaneseq
        %v979 = vshrl.u32 %v978, 7
        %v980 = vsub.s32 1, %v979
        %v981 = vrot.slane %v954, %v980
        %v982 = vmul.f32 %v974, %v981
        %v983 = vmul.f32 %v975, %v981
        %v984 = vmul.f32 %v976, %v981
        %v985 = vmul.f32 %v977, %v981
        %v986 = vadd.f32 %v970, %v982
        %v987 = vadd.f32 %v971, %v983
        %v988 = vadd.f32 %v972, %v984
        %v989 = vadd.f32 %v973, %v985
        %v990 = vld [vmem:[#allocation2 + $0x3] sm:$0xff]
        %v991 = vld [vmem:[#allocation2 + $0xb] sm:$0xff]
        %v992 = vld [vmem:[#allocation2 + $0x13] sm:$0xff]
        %v993 = vld [vmem:[#allocation2 + $0x1b] sm:$0xff]
        %v994 = vlaneseq
        %v995 = vshrl.u32 %v994, 7
        %v996 = vsub.s32 2, %v995
        %v997 = vrot.slane %v954, %v996
        %v998 = vmul.f32 %v990, %v997
        %v999 = vmul.f32 %v991, %v997
        %v1000 = vmul.f32 %v992, %v997
        %v1001 = vmul.f32 %v993, %v997
        %v1002 = vadd.f32 %v986, %v998
        %v1003 = vadd.f32 %v987, %v999
        %v1004 = vadd.f32 %v988, %v1000
        %v1005 = vadd.f32 %v989, %v1001
        %v1006 = vld [vmem:[#allocation2 + $0x4] sm:$0xff]
        %v1007 = vld [vmem:[#allocation2 + $0xc] sm:$0xff]
        %v1008 = vld [vmem:[#allocation2 + $0x14] sm:$0xff]
        %v1009 = vld [vmem:[#allocation2 + $0x1c] sm:$0xff]
        %v1010 = vlaneseq
        %v1011 = vshrl.u32 %v1010, 7
        %v1012 = vsub.s32 3, %v1011
        %v1013 = vrot.slane %v954, %v1012
        %v1014 = vmul.f32 %v1006, %v1013
        %v1015 = vmul.f32 %v1007, %v1013
        %v1016 = vmul.f32 %v1008, %v1013
        %v1017 = vmul.f32 %v1009, %v1013
        %v1018 = vadd.f32 %v1002, %v1014
        %v1019 = vadd.f32 %v1003, %v1015
        %v1020 = vadd.f32 %v1004, %v1016
        %v1021 = vadd.f32 %v1005, %v1017
        %v1022 = vld [vmem:[#allocation2 + $0x5] sm:$0xff]
        %v1023 = vld [vmem:[#allocation2 + $0xd] sm:$0xff]
        %v1024 = vld [vmem:[#allocation2 + $0x15] sm:$0xff]
        %v1025 = vld [vmem:[#allocation2 + $0x1d] sm:$0xff]
        %v1026 = vlaneseq
        %v1027 = vshrl.u32 %v1026, 7
        %v1028 = vsub.s32 4, %v1027
        %v1029 = vrot.slane %v954, %v1028
        %v1030 = vmul.f32 %v1022, %v1029
        %v1031 = vmul.f32 %v1023, %v1029
        %v1032 = vmul.f32 %v1024, %v1029
        %v1033 = vmul.f32 %v1025, %v1029
        %v1034 = vadd.f32 %v1018, %v1030
        %v1035 = vadd.f32 %v1019, %v1031
        %v1036 = vadd.f32 %v1020, %v1032
        %v1037 = vadd.f32 %v1021, %v1033
        %v1038 = vld [vmem:[#allocation2 + $0x6] sm:$0xff]
        %v1039 = vld [vmem:[#allocation2 + $0xe] sm:$0xff]
        %v1040 = vld [vmem:[#allocation2 + $0x16] sm:$0xff]
        %v1041 = vld [vmem:[#allocation2 + $0x1e] sm:$0xff]
        %v1042 = vlaneseq
        %v1043 = vshrl.u32 %v1042, 7
        %v1044 = vsub.s32 5, %v1043
        %v1045 = vrot.slane %v954, %v1044
        %v1046 = vmul.f32 %v1038, %v1045
        %v1047 = vmul.f32 %v1039, %v1045
        %v1048 = vmul.f32 %v1040, %v1045
        %v1049 = vmul.f32 %v1041, %v1045
        %v1050 = vadd.f32 %v1034, %v1046
        %v1051 = vadd.f32 %v1035, %v1047
        %v1052 = vadd.f32 %v1036, %v1048
        %v1053 = vadd.f32 %v1037, %v1049
        %v1054 = vld [vmem:[#allocation2 + $0x7] sm:$0xff]
        %v1055 = vld [vmem:[#allocation2 + $0xf] sm:$0xff]
        %v1056 = vld [vmem:[#allocation2 + $0x17] sm:$0xff]
        %v1057 = vld [vmem:[#allocation2 + $0x1f] sm:$0xff]
        %v1058 = vlaneseq
        %v1059 = vshrl.u32 %v1058, 7
        %v1060 = vsub.s32 6, %v1059
        %v1061 = vrot.slane %v954, %v1060
        %v1062 = vmul.f32 %v1054, %v1061
        %v1063 = vmul.f32 %v1055, %v1061
        %v1064 = vmul.f32 %v1056, %v1061
        %v1065 = vmul.f32 %v1057, %v1061
        %v1066 = vadd.f32 %v1050, %v1062
        %v1067 = vadd.f32 %v1051, %v1063
        %v1068 = vadd.f32 %v1052, %v1064
        %v1069 = vadd.f32 %v1053, %v1065
        %v1070 = vld [vmem:[#allocation2 + $0x8] sm:$0xff]
        %v1071 = vld [vmem:[#allocation2 + $0x10] sm:$0xff]
        %v1072 = vld [vmem:[#allocation2 + $0x18] sm:$0xff]
        %v1073 = vld [vmem:[#allocation2 + $0x20] sm:$0xff]
        %v1074 = vlaneseq
        %v1075 = vshrl.u32 %v1074, 7
        %v1076 = vsub.s32 7, %v1075
        %v1077 = vrot.slane %v954, %v1076
        %v1078 = vmul.f32 %v1070, %v1077
        %v1079 = vmul.f32 %v1071, %v1077
        %v1080 = vmul.f32 %v1072, %v1077
        %v1081 = vmul.f32 %v1073, %v1077
        %v1082 = vadd.f32 %v1066, %v1078
        %v1083 = vadd.f32 %v1067, %v1079
        %v1084 = vadd.f32 %v1068, %v1080
        %v1085 = vadd.f32 %v1069, %v1081
        %v1086 = vld [vmem:[#allocation2 + $0x21] sm:$0xff]
        %v1087 = vlaneseq
        %v1088 = vshrl.u32 %v1087, 7
        %v1089 = vsub.s32 0, %v1088
        %v1090 = vrot.slane %v955, %v1089
        %v1091 = vmul.f32 %v959, %v1090
        %v1092 = vmul.f32 %v960, %v1090
        %v1093 = vmul.f32 %v961, %v1090
        %v1094 = vmul.f32 %v1086, %v1090
        %v1095 = vadd.f32 %v1082, %v1091
        %v1096 = vadd.f32 %v1083, %v1092
        %v1097 = vadd.f32 %v1084, %v1093
        %v1098 = vadd.f32 %v1085, %v1094
        %v1099 = vld [vmem:[#allocation2 + $0x22] sm:$0xff]
        %v1100 = vlaneseq
        %v1101 = vshrl.u32 %v1100, 7
        %v1102 = vsub.s32 1, %v1101
        %v1103 = vrot.slane %v955, %v1102
        %v1104 = vmul.f32 %v975, %v1103
        %v1105 = vmul.f32 %v976, %v1103
        %v1106 = vmul.f32 %v977, %v1103
        %v1107 = vmul.f32 %v1099, %v1103
        %v1108 = vadd.f32 %v1095, %v1104
        %v1109 = vadd.f32 %v1096, %v1105
        %v1110 = vadd.f32 %v1097, %v1106
        %v1111 = vadd.f32 %v1098, %v1107
        %v1112 = vld [vmem:[#allocation2 + $0x23] sm:$0xff]
        %v1113 = vlaneseq
        %v1114 = vshrl.u32 %v1113, 7
        %v1115 = vsub.s32 2, %v1114
        %v1116 = vrot.slane %v955, %v1115
        %v1117 = vmul.f32 %v991, %v1116
        %v1118 = vmul.f32 %v992, %v1116
        %v1119 = vmul.f32 %v993, %v1116
        %v1120 = vmul.f32 %v1112, %v1116
        %v1121 = vadd.f32 %v1108, %v1117
        %v1122 = vadd.f32 %v1109, %v1118
        %v1123 = vadd.f32 %v1110, %v1119
        %v1124 = vadd.f32 %v1111, %v1120
        %v1125 = vld [vmem:[#allocation2 + $0x24] sm:$0xff]
        %v1126 = vlaneseq
        %v1127 = vshrl.u32 %v1126, 7
        %v1128 = vsub.s32 3, %v1127
        %v1129 = vrot.slane %v955, %v1128
        %v1130 = vmul.f32 %v1007, %v1129
        %v1131 = vmul.f32 %v1008, %v1129
        %v1132 = vmul.f32 %v1009, %v1129
        %v1133 = vmul.f32 %v1125, %v1129
        %v1134 = vadd.f32 %v1121, %v1130
        %v1135 = vadd.f32 %v1122, %v1131
        %v1136 = vadd.f32 %v1123, %v1132
        %v1137 = vadd.f32 %v1124, %v1133
        %v1138 = vld [vmem:[#allocation2 + $0x25] sm:$0xff]
        %v1139 = vlaneseq
        %v1140 = vshrl.u32 %v1139, 7
        %v1141 = vsub.s32 4, %v1140
        %v1142 = vrot.slane %v955, %v1141
        %v1143 = vmul.f32 %v1023, %v1142
        %v1144 = vmul.f32 %v1024, %v1142
        %v1145 = vmul.f32 %v1025, %v1142
        %v1146 = vmul.f32 %v1138, %v1142
        %v1147 = vadd.f32 %v1134, %v1143
        %v1148 = vadd.f32 %v1135, %v1144
        %v1149 = vadd.f32 %v1136, %v1145
        %v1150 = vadd.f32 %v1137, %v1146
        %v1151 = vld [vmem:[#allocation2 + $0x26] sm:$0xff]
        %v1152 = vlaneseq
        %v1153 = vshrl.u32 %v1152, 7
        %v1154 = vsub.s32 5, %v1153
        %v1155 = vrot.slane %v955, %v1154
        %v1156 = vmul.f32 %v1039, %v1155
        %v1157 = vmul.f32 %v1040, %v1155
        %v1158 = vmul.f32 %v1041, %v1155
        %v1159 = vmul.f32 %v1151, %v1155
        %v1160 = vadd.f32 %v1147, %v1156
        %v1161 = vadd.f32 %v1148, %v1157
        %v1162 = vadd.f32 %v1149, %v1158
        %v1163 = vadd.f32 %v1150, %v1159
        %v1164 = vld [vmem:[#allocation2 + $0x27] sm:$0xff]
        %v1165 = vlaneseq
        %v1166 = vshrl.u32 %v1165, 7
        %v1167 = vsub.s32 6, %v1166
        %v1168 = vrot.slane %v955, %v1167
        %v1169 = vmul.f32 %v1055, %v1168
        %v1170 = vmul.f32 %v1056, %v1168
        %v1171 = vmul.f32 %v1057, %v1168
        %v1172 = vmul.f32 %v1164, %v1168
        %v1173 = vadd.f32 %v1160, %v1169
        %v1174 = vadd.f32 %v1161, %v1170
        %v1175 = vadd.f32 %v1162, %v1171
        %v1176 = vadd.f32 %v1163, %v1172
        %v1177 = vld [vmem:[#allocation2 + $0x28] sm:$0xff]
        %v1178 = vlaneseq
        %v1179 = vshrl.u32 %v1178, 7
        %v1180 = vsub.s32 7, %v1179
        %v1181 = vrot.slane %v955, %v1180
        %v1182 = vmul.f32 %v1071, %v1181
        %v1183 = vmul.f32 %v1072, %v1181
        %v1184 = vmul.f32 %v1073, %v1181
        %v1185 = vmul.f32 %v1177, %v1181
        %v1186 = vadd.f32 %v1173, %v1182
        %v1187 = vadd.f32 %v1174, %v1183
        %v1188 = vadd.f32 %v1175, %v1184
        %v1189 = vadd.f32 %v1176, %v1185
        %v1190 = vld [vmem:[#allocation2 + $0x29] sm:$0xff]
        %v1191 = vlaneseq
        %v1192 = vshrl.u32 %v1191, 7
        %v1193 = vsub.s32 0, %v1192
        %v1194 = vrot.slane %v956, %v1193
        %v1195 = vmul.f32 %v960, %v1194
        %v1196 = vmul.f32 %v961, %v1194
        %v1197 = vmul.f32 %v1086, %v1194
        %v1198 = vmul.f32 %v1190, %v1194
        %v1199 = vadd.f32 %v1186, %v1195
        %v1200 = vadd.f32 %v1187, %v1196
        %v1201 = vadd.f32 %v1188, %v1197
        %v1202 = vadd.f32 %v1189, %v1198
        %v1203 = vld [vmem:[#allocation2 + $0x2a] sm:$0xff]
        %v1204 = vlaneseq
        %v1205 = vshrl.u32 %v1204, 7
        %v1206 = vsub.s32 1, %v1205
        %v1207 = vrot.slane %v956, %v1206
        %v1208 = vmul.f32 %v976, %v1207
        %v1209 = vmul.f32 %v977, %v1207
        %v1210 = vmul.f32 %v1099, %v1207
        %v1211 = vmul.f32 %v1203, %v1207
        %v1212 = vadd.f32 %v1199, %v1208
        %v1213 = vadd.f32 %v1200, %v1209
        %v1214 = vadd.f32 %v1201, %v1210
        %v1215 = vadd.f32 %v1202, %v1211
        %v1216 = vld [vmem:[#allocation2 + $0x2b] sm:$0xff]
        %v1217 = vlaneseq
        %v1218 = vshrl.u32 %v1217, 7
        %v1219 = vsub.s32 2, %v1218
        %v1220 = vrot.slane %v956, %v1219
        %v1221 = vmul.f32 %v992, %v1220
        %v1222 = vmul.f32 %v993, %v1220
        %v1223 = vmul.f32 %v1112, %v1220
        %v1224 = vmul.f32 %v1216, %v1220
        %v1225 = vadd.f32 %v1212, %v1221
        %v1226 = vadd.f32 %v1213, %v1222
        %v1227 = vadd.f32 %v1214, %v1223
        %v1228 = vadd.f32 %v1215, %v1224
        %v1229 = vld [vmem:[#allocation2 + $0x2c] sm:$0xff]
        %v1230 = vlaneseq
        %v1231 = vshrl.u32 %v1230, 7
        %v1232 = vsub.s32 3, %v1231
        %v1233 = vrot.slane %v956, %v1232
        %v1234 = vmul.f32 %v1008, %v1233
        %v1235 = vmul.f32 %v1009, %v1233
        %v1236 = vmul.f32 %v1125, %v1233
        %v1237 = vmul.f32 %v1229, %v1233
        %v1238 = vadd.f32 %v1225, %v1234
        %v1239 = vadd.f32 %v1226, %v1235
        %v1240 = vadd.f32 %v1227, %v1236
        %v1241 = vadd.f32 %v1228, %v1237
        %v1242 = vld [vmem:[#allocation2 + $0x2d] sm:$0xff]
        %v1243 = vlaneseq
        %v1244 = vshrl.u32 %v1243, 7
        %v1245 = vsub.s32 4, %v1244
        %v1246 = vrot.slane %v956, %v1245
        %v1247 = vmul.f32 %v1024, %v1246
        %v1248 = vmul.f32 %v1025, %v1246
        %v1249 = vmul.f32 %v1138, %v1246
        %v1250 = vmul.f32 %v1242, %v1246
        %v1251 = vadd.f32 %v1238, %v1247
        %v1252 = vadd.f32 %v1239, %v1248
        %v1253 = vadd.f32 %v1240, %v1249
        %v1254 = vadd.f32 %v1241, %v1250
        %v1255 = vld [vmem:[#allocation2 + $0x2e] sm:$0xff]
        %v1256 = vlaneseq
        %v1257 = vshrl.u32 %v1256, 7
        %v1258 = vsub.s32 5, %v1257
        %v1259 = vrot.slane %v956, %v1258
        %v1260 = vmul.f32 %v1040, %v1259
        %v1261 = vmul.f32 %v1041, %v1259
        %v1262 = vmul.f32 %v1151, %v1259
        %v1263 = vmul.f32 %v1255, %v1259
        %v1264 = vadd.f32 %v1251, %v1260
        %v1265 = vadd.f32 %v1252, %v1261
        %v1266 = vadd.f32 %v1253, %v1262
        %v1267 = vadd.f32 %v1254, %v1263
        %v1268 = vld [vmem:[#allocation2 + $0x2f] sm:$0xff]
        %v1269 = vlaneseq
        %v1270 = vshrl.u32 %v1269, 7
        %v1271 = vsub.s32 6, %v1270
        %v1272 = vrot.slane %v956, %v1271
        %v1273 = vmul.f32 %v1056, %v1272
        %v1274 = vmul.f32 %v1057, %v1272
        %v1275 = vmul.f32 %v1164, %v1272
        %v1276 = vmul.f32 %v1268, %v1272
        %v1277 = vadd.f32 %v1264, %v1273
        %v1278 = vadd.f32 %v1265, %v1274
        %v1279 = vadd.f32 %v1266, %v1275
        %v1280 = vadd.f32 %v1267, %v1276
        %v1281 = vld [vmem:[#allocation2 + $0x30] sm:$0xff]
        %v1282 = vlaneseq
        %v1283 = vshrl.u32 %v1282, 7
        %v1284 = vsub.s32 7, %v1283
        %v1285 = vrot.slane %v956, %v1284
        %v1286 = vmul.f32 %v1072, %v1285
        %v1287 = vmul.f32 %v1073, %v1285
        %v1288 = vmul.f32 %v1177, %v1285
        %v1289 = vmul.f32 %v1281, %v1285
        %v1290 = vadd.f32 %v1277, %v1286
        %v1291 = vadd.f32 %v1278, %v1287
        %v1292 = vadd.f32 %v1279, %v1288
        %v1293 = vadd.f32 %v1280, %v1289
        %v1294 = vld [vmem:[#allocation2 + $0x31] sm:$0xff]
        %v1295 = vlaneseq
        %v1296 = vshrl.u32 %v1295, 7
        %v1297 = vsub.s32 0, %v1296
        %v1298 = vrot.slane %v957, %v1297
        %v1299 = vmul.f32 %v961, %v1298
        %v1300 = vmul.f32 %v1086, %v1298
        %v1301 = vmul.f32 %v1190, %v1298
        %v1302 = vmul.f32 %v1294, %v1298
        %v1303 = vadd.f32 %v1290, %v1299
        %v1304 = vadd.f32 %v1291, %v1300
        %v1305 = vadd.f32 %v1292, %v1301
        %v1306 = vadd.f32 %v1293, %v1302
        %v1307 = vld [vmem:[#allocation2 + $0x32] sm:$0xff]
        %v1308 = vlaneseq
        %v1309 = vshrl.u32 %v1308, 7
        %v1310 = vsub.s32 1, %v1309
        %v1311 = vrot.slane %v957, %v1310
        %v1312 = vmul.f32 %v977, %v1311
        %v1313 = vmul.f32 %v1099, %v1311
        %v1314 = vmul.f32 %v1203, %v1311
        %v1315 = vmul.f32 %v1307, %v1311
        %v1316 = vadd.f32 %v1303, %v1312
        %v1317 = vadd.f32 %v1304, %v1313
        %v1318 = vadd.f32 %v1305, %v1314
        %v1319 = vadd.f32 %v1306, %v1315
        %v1320 = vld [vmem:[#allocation2 + $0x33] sm:$0xff]
        %v1321 = vlaneseq
        %v1322 = vshrl.u32 %v1321, 7
        %v1323 = vsub.s32 2, %v1322
        %v1324 = vrot.slane %v957, %v1323
        %v1325 = vmul.f32 %v993, %v1324
        %v1326 = vmul.f32 %v1112, %v1324
        %v1327 = vmul.f32 %v1216, %v1324
        %v1328 = vmul.f32 %v1320, %v1324
        %v1329 = vadd.f32 %v1316, %v1325
        %v1330 = vadd.f32 %v1317, %v1326
        %v1331 = vadd.f32 %v1318, %v1327
        %v1332 = vadd.f32 %v1319, %v1328
        %v1333 = vld [vmem:[#allocation2 + $0x34] sm:$0xff]
        %v1334 = vlaneseq
        %v1335 = vshrl.u32 %v1334, 7
        %v1336 = vsub.s32 3, %v1335
        %v1337 = vrot.slane %v957, %v1336
        %v1338 = vmul.f32 %v1009, %v1337
        %v1339 = vmul.f32 %v1125, %v1337
        %v1340 = vmul.f32 %v1229, %v1337
        %v1341 = vmul.f32 %v1333, %v1337
        %v1342 = vadd.f32 %v1329, %v1338
        %v1343 = vadd.f32 %v1330, %v1339
        %v1344 = vadd.f32 %v1331, %v1340
        %v1345 = vadd.f32 %v1332, %v1341
        %v1346 = vld [vmem:[#allocation2 + $0x35] sm:$0xff]
        %v1347 = vlaneseq
        %v1348 = vshrl.u32 %v1347, 7
        %v1349 = vsub.s32 4, %v1348
        %v1350 = vrot.slane %v957, %v1349
        %v1351 = vmul.f32 %v1025, %v1350
        %v1352 = vmul.f32 %v1138, %v1350
        %v1353 = vmul.f32 %v1242, %v1350
        %v1354 = vmul.f32 %v1346, %v1350
        %v1355 = vadd.f32 %v1342, %v1351
        %v1356 = vadd.f32 %v1343, %v1352
        %v1357 = vadd.f32 %v1344, %v1353
        %v1358 = vadd.f32 %v1345, %v1354
        %v1359 = vld [vmem:[#allocation2 + $0x36] sm:$0xff]
        %v1360 = vlaneseq
        %v1361 = vshrl.u32 %v1360, 7
        %v1362 = vsub.s32 5, %v1361
        %v1363 = vrot.slane %v957, %v1362
        %v1364 = vmul.f32 %v1041, %v1363
        %v1365 = vmul.f32 %v1151, %v1363
        %v1366 = vmul.f32 %v1255, %v1363
        %v1367 = vmul.f32 %v1359, %v1363
        %v1368 = vadd.f32 %v1355, %v1364
        %v1369 = vadd.f32 %v1356, %v1365
        %v1370 = vadd.f32 %v1357, %v1366
        %v1371 = vadd.f32 %v1358, %v1367
        %v1372 = vld [vmem:[#allocation2 + $0x37] sm:$0xff]
        %v1373 = vlaneseq
        %v1374 = vshrl.u32 %v1373, 7
        %v1375 = vsub.s32 6, %v1374
        %v1376 = vrot.slane %v957, %v1375
        %v1377 = vmul.f32 %v1057, %v1376
        %v1378 = vmul.f32 %v1164, %v1376
        %v1379 = vmul.f32 %v1268, %v1376
        %v1380 = vmul.f32 %v1372, %v1376
        %v1381 = vadd.f32 %v1368, %v1377
        %v1382 = vadd.f32 %v1369, %v1378
        %v1383 = vadd.f32 %v1370, %v1379
        %v1384 = vadd.f32 %v1371, %v1380
        %v1385 = vlaneseq
        %v1386 = vshrl.u32 %v1385, 7
        %v1387 = vsub.s32 4, %v1386
        %v1388 = vrot.slane %v493, %v1387
        %v1389 = vadd.f32 %v1381, %v1388
        %v1390 = vadd.f32 %v1382, %v1388
        %v1391 = vadd.f32 %v1383, %v1388
        %v1392 = vadd.f32 %v1384, %v1388
        %v1393 = vlaneseq
        %v1394 = vshrl.u32 %v1393, 7
        %v1395 = vsub.s32 5, %v1394
        %v1396 = vrot.slane %v493, %v1395
        %v1397 = vmul.f32 %v1389, %v1396
        %v1398 = vmul.f32 %v1390, %v1396
        %v1399 = vmul.f32 %v1391, %v1396
        %v1400 = vmul.f32 %v1392, %v1396
        %v1401 = vlaneseq
        %v1402 = vshrl.u32 %v1401, 7
        %v1403 = vsub.s32 6, %v1402
        %v1404 = vrot.slane %v493, %v1403
        %v1405 = vadd.f32 %v1397, %v1404
        %v1406 = vadd.f32 %v1398, %v1404
        %v1407 = vadd.f32 %v1399, %v1404
        %v1408 = vadd.f32 %v1400, %v1404
        %v1409 = vxor.u32 %v1405, 2147483648
        %v1410 = vxor.u32 %v1406, 2147483648
        %v1411 = vxor.u32 %v1407, 2147483648
        %v1412 = vxor.u32 %v1408, 2147483648
        %v1413 = vmul.f32 %v1409, 1.442695
        %v1414 = vpow.pop %v1413
        %v1415 = vmul.f32 %v1410, 1.442695
        %v1416 = vpow.pop %v1415
        %v1417 = vmul.f32 %v1411, 1.442695
        %v1418 = vpow.pop %v1417
        %v1419 = vmul.f32 %v1412, 1.442695
        %v1420 = vpow.pop %v1419
        %v1421 = vadd.f32 %v1414, 1.0
        %v1422 = vadd.f32 %v1416, 1.0
        %v1423 = vadd.f32 %v1418, 1.0
        %v1424 = vadd.f32 %v1420, 1.0
        %v1425 = vrcp.pop %v1421
        %v1426 = vmul.f32 1.0, %v1425
        %v1427 = vrcp.pop %v1422
        %v1428 = vmul.f32 1.0, %v1427
        %v1429 = vrcp.pop %v1423
        %v1430 = vmul.f32 1.0, %v1429
        %v1431 = vrcp.pop %v1424
        %v1432 = vmul.f32 1.0, %v1431
        %v1433 = vmul.f32 %v1405, %v1426
        %v1434 = vmul.f32 %v1406, %v1428
        %v1435 = vmul.f32 %v1407, %v1430
        %v1436 = vmul.f32 %v1408, %v1432
        %v1437 = vpack.c.bf16 %v1434, %v1433
        %v1438 = vpack.c.bf16 %v1436, %v1435
        %v1439 = vld [vmem:[#allocation14] sm:$0xf]
        %v1440 = vld [vmem:[#allocation14 + $0x4] sm:$0xf]
        %v1441 = vld [vmem:[#allocation14 + $0x8] sm:$0xf]
        %v1442 = vld [vmem:[#allocation14 + $0xc] sm:$0xf]
        %v1443 = vld [vmem:[#allocation14 + $0x10] sm:$0xf]
        %v1444 = vld [vmem:[#allocation14 + $0x14] sm:$0xf]
        %v1445 = vld [vmem:[#allocation14 + $0x18] sm:$0xf]
        %v1446 = vld [vmem:[#allocation14 + $0x1c] sm:$0xf]
        %v1447 = vld [vmem:[#allocation14 + $0x20] sm:$0xf]
        %v1448 = vld [vmem:[#allocation14 + $0x24] sm:$0xf]
        %v1449 = vld [vmem:[#allocation14 + $0x28] sm:$0xf]
        %v1450 = vld [vmem:[#allocation14 + $0x2c] sm:$0xf]
        %v1451 = vld [vmem:[#allocation14 + $0x30] sm:$0xf]
        %v1452 = vld [vmem:[#allocation14 + $0x34] sm:$0xf]
        %v1453 = vld [vmem:[#allocation14 + $0x38] sm:$0xf]
        %v1454 = vld [vmem:[#allocation14 + $0x3c] sm:$0xf]
        %v1455 = vlaneseq
        %v1456 = vshrl.u32 %v1455, 7
        %v1457 = vsub.s32 7, %v1456
        %v1458 = vrot.slane %v493, %v1457
        %v1475 = vunpack.c.l.b16 %v1439
        %v1476 = vunpack.c.l.b16 %v1440
        %v1477 = vunpack.c.l.b16 %v1441
        %v1478 = vunpack.c.l.b16 %v1442
        %v1479 = vunpack.c.l.b16 %v1443
        %v1480 = vunpack.c.l.b16 %v1444
        %v1481 = vunpack.c.l.b16 %v1445
        %v1482 = vunpack.c.l.b16 %v1446
        %v1483 = vunpack.c.l.b16 %v1447
        %v1484 = vunpack.c.l.b16 %v1448
        %v1485 = vunpack.c.l.b16 %v1449
        %v1486 = vunpack.c.l.b16 %v1450
        %v1487 = vunpack.c.l.b16 %v1451
        %v1488 = vunpack.c.l.b16 %v1452
        %v1489 = vunpack.c.l.b16 %v1453
        %v1490 = vunpack.c.l.b16 %v1454
        %v1491 = vpack.c.b16 %v1476, %v1475
        %v1492 = vpack.c.b16 %v1478, %v1477
        %v1493 = vpack.c.b16 %v1480, %v1479
        %v1494 = vpack.c.b16 %v1482, %v1481
        %v1495 = vpack.c.b16 %v1484, %v1483
        %v1496 = vpack.c.b16 %v1486, %v1485
        %v1497 = vpack.c.b16 %v1488, %v1487
        %v1498 = vpack.c.b16 %v1490, %v1489
        %1507 = vmatprep.subr.bf16.mxu0 0
        %1508 = vmatpush1.bf16.msra.mxu0 %v1498
        %1509 = vmatprep.subr.bf16.mxu0 0
        %1510 = vmatpush1.bf16.msra.mxu0 %v1497
        %1511 = vmatprep.subr.bf16.mxu0 0
        %1512 = vmatpush1.bf16.msra.mxu0 %v1496
        %1513 = vmatprep.subr.bf16.mxu0 0
        %1514 = vmatpush1.bf16.msra.mxu0 %v1495
        %1515 = vmatprep.subr.bf16.mxu0 0
        %1516 = vmatpush1.bf16.msra.mxu0 %v1494
        %1517 = vmatprep.subr.bf16.mxu0 0
        %1518 = vmatpush1.bf16.msra.mxu0 %v1493
        %1519 = vmatprep.subr.bf16.mxu0 0
        %1520 = vmatpush1.bf16.msra.mxu0 %v1492
        %1521 = vmatprep.subr.bf16.mxu0 0
        %1522 = vmatpush1.bf16.msra.mxu0 %v1491
        %1523 = vmatprep.subr.bf16.mxu0 0
        %1524 = vmatpush2.bf16.msra.mxu0 0
        %1525 = vmatprep.subr.bf16.mxu0 0
        %1526 = vmatpush2.bf16.msra.mxu0 0
        %1527 = vmatprep.subr.bf16.mxu0 0
        %1528 = vmatpush2.bf16.msra.mxu0 0
        %1529 = vmatprep.subr.bf16.mxu0 0
        %1530 = vmatpush2.bf16.msra.mxu0 0
        %1531 = vmatprep.subr.bf16.mxu0 0
        %1532 = vmatpush2.bf16.msra.mxu0 0
        %1533 = vmatprep.subr.bf16.mxu0 0
        %1534 = vmatpush2.bf16.msra.mxu0 0
        %1535 = vmatprep.subr.bf16.mxu0 0
        %1536 = vmatpush2.bf16.msra.mxu0 0
        %1537 = vmatprep.subr.bf16.mxu0 0
        %1538 = vmatpush2.bf16.msra.mxu0 0
        %1539 = vmatprep.mubr.bf16.mxu0 0
        %1540 = vmatmul.mubr.bf16.gmra.mxu0 %v1437
        %v1541 = vpop.f32.mrf.mxu0
        %v1542 = vadd.f32 %v1458, %v1541
        %v1543 = vpop.f32.mrf.mxu0
        %v1544 = vpop.f32.mrf.mxu0
        %v1545 = vadd.f32 %v1458, %v1544
        %v1546 = vpop.f32.mrf.mxu0
        %1547 = vmatprep.mubr.bf16.mxu0 0
        %1548 = vmatmul.mubr.bf16.gmra.mxu0 %v1438
        %v1549 = vpop.f32.mrf.mxu0
        %v1550 = vadd.f32 %v1458, %v1549
        %v1551 = vpop.f32.mrf.mxu0
        %v1552 = vpop.f32.mrf.mxu0
        %v1553 = vadd.f32 %v1458, %v1552
        %v1554 = vpop.f32.mrf.mxu0
        %1555 = vdwg.mxu0
        %v1556 = vld [vmem:[%s405] sm:$0xff]
        %v1557 = vld [vmem:[%s405 + $0x8] sm:$0xff]
        %v1558 = vld [vmem:[%s405 + $0x10] sm:$0xff]
        %v1559 = vld [vmem:[%s405 + $0x18] sm:$0xff]
        %v1560 = vadd.f32 %v1542, %v1556
        %v1561 = vadd.f32 %v1545, %v1557
        %v1562 = vadd.f32 %v1550, %v1558
        %v1563 = vadd.f32 %v1553, %v1559
        %1564 = vst [vmem:[%s479] sm:$0xff] %v1560
        %1565 = vst [vmem:[%s479 + $0x8] sm:$0xff] %v1561
        %1566 = vst [vmem:[%s479 + $0x10] sm:$0xff] %v1562
        %1567 = vst [vmem:[%s479 + $0x18] sm:$0xff] %v1563
        %s1568 = sand.u32 %s235, 1
        %s1569 = scalar_lea.sflag [#allocation5], %s1568
        %s1570 = sand.u32 %s235, 1
        %s1571 = smul.addr %s1570, 32
        %s1572 = scalar_lea.vmem [#allocation15], %s1571
        // Predicated region
        $region77: #{tpu_custom_call.1} parent=47 // pred_check
          %p1573 = pneg %p245
        $region78: #{tpu_custom_call.1} parent=47 // pred_check_branch
          %1575 = sbr.rel (%p1573) target = $region80
        $region79: #{tpu_custom_call.1} parent=47 // pred_region
          %s1576 = smul.u32 4, %s34
          %s1578 = ssub.s32 512, 512
          %1579 = vsyncadd %s1569, %s1578
          %s1580 = smul.addr %s33, 8
          %s1581 = sadd.s32 %s1576, %s1580
          %s1582 = smul.addr %s1581, 128
          %s1583 = scalar_lea.hbm %s7, %s1582
          %s1584 = sshll.u32 %s1572, 4
          %s1585 = int_to_ptr.vmem [resolvable:$true] %s1584
          %1590 = dma.vmem_to_hbm [thread:$0]  %s1585, 512, %s1583, %s1569, 128, 128, 8
        $region80: #{tpu_custom_call.1} parent=47 // pred_fallthru
          _
      $region48: #{tpu_custom_call.1} parent=5 // pred_fallthru
        _
      %p1591 = scmp.le.s32.totalorder 2, %s24
      // Predicated region
      $region81: #{tpu_custom_call.1} parent=5 // pred_check
        %p1592 = pneg %p1591
      $region82: #{tpu_custom_call.1} parent=5 // pred_check_branch
        %1594 = sbr.rel (%p1592) target = $region84
      $region83: #{tpu_custom_call.1} parent=5 // pred_region
        %s1595 = ssub.s32 %s24, 2
        // Predicated region
        $region85: #{tpu_custom_call.1} parent=83 // pred_check
          %p1596 = pneg %p251
        $region86: #{tpu_custom_call.1} parent=83 // pred_check_branch
          %1598 = sbr.rel (%p1596) target = $region88
        $region87: #{tpu_custom_call.1} parent=83 // pred_region
          %s1599 = sand.u32 %s236, 1
          %s1600 = scalar_lea.sflag [#allocation5], %s1599
          %s1601 = sand.u32 %s236, 1
          %s1602 = smul.addr %s1601, 32
          %s1603 = scalar_lea.vmem [#allocation15], %s1602
          %1604 = dma.done %s1600, 512
        $region88: #{tpu_custom_call.1} parent=83 // pred_fallthru
          _
      $region84: #{tpu_custom_call.1} parent=5 // pred_fallthru
        _
    $region6: #{tpu_custom_call.1} parent=1 // loop_footer
      %s28 = sadd.s32 1, %s24
    $region7: #{tpu_custom_call.1} parent=1 // loop_footer_branch
      %23 = sbr.rel target = $region3
    $region8: #{tpu_custom_call.1} parent=1 // loop_exit
      _
    %1605 = vsyncpa [#allocation4], 1
    %s1606 = scalar_lea.sflag [#allocation4], 1
    %1607 = vsyncpa %s1606, 1
    %1608 = vsyncpa [#allocation7], 1
    %s1609 = scalar_lea.sflag [#allocation7], 1
    %1610 = vsyncpa %s1609, 1
    %1611 = vsyncpa [#allocation10], 1
    %1612 = vsyncpa [#allocation13], 1
    %1613 = vsyncpa [#allocation5], 1
    %s1614 = scalar_lea.sflag [#allocation5], 1
    %1615 = vsyncpa %s1614, 1

</llo_original>
